<compile_context>
chip_gen: v6e
topology: v6e:2x2x1
jax: 0.10.0
libtpu: 0.0.40
codegen_flags: <defaults>
</compile_context>

<pallas_src>
import jax
import jax.numpy as jnp
from jax.experimental import pallas as pl
from jax.experimental.pallas import tpu as pltpu

# ---------------- small, module-consistent hyper-parameters ----------------
B = 2            # batch
T = 16           # sequence length (max_len)
IN_DIM = 16      # n_mel_channels (kept small for the test)
HID = 16         # style_hidden
OUT_DIM = 8      # style_vector_dim
KER = 5          # style_kernel_size
PAD = (KER - 1) // 2
N_HEAD = 2       # style_head
D_K = HID // N_HEAD
D_V = HID // N_HEAD
TEMP = float(HID) ** 0.5     # StyleSpeech MHA: temperature = sqrt(d_model)
NEG_INF = -1e9


def _softplus(x):
    return jnp.maximum(x, 0.0) + jnp.log1p(jnp.exp(-jnp.abs(x)))


def _mish(x):
    return x * jnp.tanh(_softplus(x))


def _sigmoid(x):
    return 1.0 / (1.0 + jnp.exp(-x))


# ======================= fused Pallas kernel =======================

def _mel_style_kernel(x_ref, padm_ref, keep_ref, pool_ref,
                      ws1_ref, bs1_ref, ws2_ref, bs2_ref,
                      wc1_ref, bc1_ref, wc2_ref, bc2_ref,
                      wqkv_ref, bqkv_ref, wo_ref, bo_ref, wf_ref, bf_ref,
                      out_ref, pad_ref):
    """Whole MelStyleEncoder forward for the full batch, fused in one kernel."""
    f32 = jnp.float32

    # Zero only the 'same'-padding edge rows once; the middle rows are rewritten
    # per conv, so the PAD rows at both ends stay zero for both Conv1dGLU blocks.
    pad_ref[:, 0:PAD, :] = jnp.zeros((B, PAD, HID), f32)
    pad_ref[:, PAD + T:, :] = jnp.zeros((B, PAD, HID), f32)

    # ---- spectral: Linear -> Mish -> Linear -> Mish, whole batch flattened ----
    h = _mish(jnp.dot(x_ref[...], ws1_ref[...], preferred_element_type=f32)
              + bs1_ref[...])
    h = _mish(jnp.dot(h, ws2_ref[...], preferred_element_type=f32)
              + bs2_ref[...])                                   # (B*T, HID)

    # ---- temporal: two Conv1dGLU blocks via im2col (one matmul per conv) ----
    for wc_ref, bc_ref in ((wc1_ref, bc1_ref), (wc2_ref, bc2_ref)):
        # write both sequences into the padded scratch in one store
        pad_ref[:, PAD:PAD + T, :] = h.reshape(B, T, HID)
        # im2col: lane-concat the KER sublane-shifted tap slices -> (B, T, KER*HID)
        cols = jnp.concatenate([pad_ref[:, k:k + T, :] for k in range(KER)],
                               axis=-1)
        acc = jnp.dot(cols.reshape(B * T, KER * HID), wc_ref[...],
                      preferred_element_type=f32) + bc_ref[...]  # (B*T, 2*HID)
        # GLU + residual (dropout = identity)
        h = h + acc[:, :HID] * _sigmoid(acc[:, HID:])

    # ---- masked_fill(mask.unsqueeze(-1), 0) before self-attention ----
    h = h * keep_ref[...]                                       # (B*T, HID)

    # ---- multi-head self attention: fused QKV for the whole batch ----
    qkv = jnp.dot(h, wqkv_ref[...], preferred_element_type=f32) + bqkv_ref[...]

    ctx_rows = []
    for b in range(B):                                          # tiny static unroll
        blk = qkv[b * T:(b + 1) * T, :]                         # (T, 3*HID)
        amask = padm_ref[b:b + 1, :] * NEG_INF                  # (1, T) key mask
        heads = []
        for hh in range(N_HEAD):
            qh = blk[:, hh * D_K:(hh + 1) * D_K]
            kh = blk[:, HID + hh * D_K:HID + (hh + 1) * D_K]
            vh = blk[:, 2 * HID + hh * D_V:2 * HID + (hh + 1) * D_V]
            logits = (jnp.dot(qh, kh.T, preferred_element_type=f32)
                      * (1.0 / TEMP) + amask)
            logits = logits - jnp.max(logits, axis=-1, keepdims=True)
            e = jnp.exp(logits)
            p = e * pl.reciprocal(jnp.sum(e, axis=-1, keepdims=True), approx=True)
            heads.append(jnp.dot(p, vh, preferred_element_type=f32))   # (T, D_V)
        ctx_rows.append(jnp.concatenate(heads, axis=-1))                # (T, HID)
    ctx = jnp.concatenate(ctx_rows, axis=0)                             # (B*T, HID)

    # ---- output projection + residual, final fc, masked average pool ----
    attn_out = (jnp.dot(ctx, wo_ref[...], preferred_element_type=f32)
                + bo_ref[...] + h)                                      # (B*T, HID)
    y = jnp.dot(attn_out, wf_ref[...], preferred_element_type=f32) + bf_ref[...]
    # pooling matrix already contains keep-mask / valid-length -> one store
    out_ref[...] = jnp.dot(pool_ref[...], y, preferred_element_type=f32)  # (B, OUT)


# ======================= wrapper =======================

def mel_style_encoder_forward(x, mask, params):
    """MelStyleEncoder forward.  x: (B, T, IN_DIM) f32, mask: (B, T) bool (True = pad)."""
    f32 = jnp.float32
    padm = mask.astype(f32)                                   # (B, T)  1.0 where padded
    keep2 = 1.0 - padm                                        # (B, T)  1.0 where valid
    keep_flat = keep2.reshape(B * T, 1)                       # (B*T, 1)
    lens = jnp.sum(keep2, axis=1, keepdims=True)              # (B, 1)  #valid frames
    # block-diagonal masked-average pooling matrix: out = pool @ y
    pool = (jnp.eye(B, dtype=f32)[:, :, None] * (keep2 / lens)[None, :, :]
            ).reshape(B, B * T)

    x_flat = x.reshape(B * T, IN_DIM)

    # host-side weight fusion / reshaping (trivial, once per call)
    wqkv = jnp.concatenate([params['wq'], params['wk'], params['wv']], axis=1)
    bqkv = jnp.concatenate([params['bq'], params['bk'], params['bv']], axis=1)
    wc1f = params['wc1'].reshape(KER * HID, 2 * HID)
    wc2f = params['wc2'].reshape(KER * HID, 2 * HID)

    args = (x_flat, padm, keep_flat, pool,
            params['ws1'], params['bs1'], params['ws2'], params['bs2'],
            wc1f, params['bc1'], wc2f, params['bc2'],
            wqkv, bqkv, params['wo'], params['bo'],
            params['wf'], params['bf'])

    # advisory cost estimate for XLA scheduling around the custom call
    m = B * T
    flops = (2 * m * IN_DIM * HID + 2 * m * HID * HID                 # spectral
             + 2 * 2 * m * (KER * HID) * (2 * HID)                    # two convs
             + 2 * m * HID * (3 * HID)                                # fused QKV
             + 2 * B * N_HEAD * (T * D_K * T + T * T * D_V)           # attention
             + 2 * m * HID * HID + 2 * m * HID * OUT_DIM              # wo + fc
             + 2 * B * m * OUT_DIM)                                   # pooling
    transcendentals = m * HID * 8 + B * N_HEAD * T * T
    bytes_accessed = sum(int(a.size) * 4 for a in args) + B * OUT_DIM * 4

    return pl.pallas_call(
        _mel_style_kernel,
        out_shape=jax.ShapeDtypeStruct((B, OUT_DIM), jnp.float32),
        in_specs=[pl.BlockSpec(memory_space=pltpu.MemorySpace.VMEM) for _ in args],
        out_specs=pl.BlockSpec(memory_space=pltpu.MemorySpace.VMEM),
        scratch_shapes=[pltpu.VMEM((B, T + 2 * PAD, HID), jnp.float32)],
        cost_estimate=pl.CostEstimate(flops=flops,
                                      transcendentals=transcendentals,
                                      bytes_accessed=bytes_accessed),
    )(*args)


# ======================= deterministic parameter init =======================

def init_params(key):
    ks = jax.random.split(key, 18)
    lin = lambda k, shape: (0.1 * jax.random.normal(k, shape)).astype(jnp.float32)
    return dict(
        # spectral
        ws1=lin(ks[0], (IN_DIM, HID)), bs1=lin(ks[1], (1, HID)),
        ws2=lin(ks[2], (HID, HID)), bs2=lin(ks[3], (1, HID)),
        # temporal: Conv1dGLU weights stored as (KER, in_ch, 2*out_ch)
        #   == torch Conv1d weight (2*out_ch, in_ch, KER) permuted to (K, in, out)
        wc1=lin(ks[4], (KER, HID, 2 * HID)), bc1=lin(ks[5], (1, 2 * HID)),
        wc2=lin(ks[6], (KER, HID, 2 * HID)), bc2=lin(ks[7], (1, 2 * HID)),
        # multi-head self attention
        wq=lin(ks[8], (HID, N_HEAD * D_K)), bq=lin(ks[9], (1, N_HEAD * D_K)),
        wk=lin(ks[10], (HID, N_HEAD * D_K)), bk=lin(ks[11], (1, N_HEAD * D_K)),
        wv=lin(ks[12], (HID, N_HEAD * D_V)), bv=lin(ks[13], (1, N_HEAD * D_V)),
        wo=lin(ks[14], (N_HEAD * D_V, HID)), bo=lin(ks[15], (1, HID)),
        # final fc
        wf=lin(ks[16], (HID, OUT_DIM)), bf=lin(ks[17], (1, OUT_DIM)),
    )


# ======================= pure-JAX reference (for verification) =======================

def reference_forward(x, mask, params):
    padm = mask.astype(jnp.float32)
    keep = (1.0 - padm)[:, :, None]                      # (B, T, 1)

    # spectral
    h = _mish(x @ params['ws1'] + params['bs1'])
    h = _mish(h @ params['ws2'] + params['bs2'])

    # temporal: two Conv1dGLU blocks
    for wc, bc in ((params['wc1'], params['bc1']), (params['wc2'], params['bc2'])):
        hp = jnp.pad(h, ((0, 0), (PAD, PAD), (0, 0)))
        acc = jnp.zeros((B, T, 2 * HID), jnp.float32) + bc
        for k in range(KER):
            acc = acc + jnp.einsum('bti,io->bto', hp[:, k:k + T, :], wc[k])
        h = h + acc[..., :HID] * jax.nn.sigmoid(acc[..., HID:])

    # masked_fill before attention
    h = h * keep

    # multi-head self attention + fc + residual
    q = (h @ params['wq'] + params['bq']).reshape(B, T, N_HEAD, D_K).transpose(0, 2, 1, 3)
    k = (h @ params['wk'] + params['bk']).reshape(B, T, N_HEAD, D_K).transpose(0, 2, 1, 3)
    v = (h @ params['wv'] + params['bv']).reshape(B, T, N_HEAD, D_V).transpose(0, 2, 1, 3)
    amask = padm[:, None, None, :] * NEG_INF             # key mask (B, 1, 1, T)
    logits = jnp.einsum('bhqd,bhkd->bhqk', q, k) / TEMP + amask
    attn = jax.nn.softmax(logits, axis=-1)
    ctx = jnp.einsum('bhqk,bhkd->bhqd', attn, v).transpose(0, 2, 1, 3).reshape(B, T, N_HEAD * D_V)
    h = ctx @ params['wo'] + params['bo'] + h

    # final fc + masked temporal average pool
    y = h @ params['wf'] + params['bf']
    w = jnp.sum(y * keep, axis=1) / jnp.sum(1.0 - padm, axis=1, keepdims=True)
    return w


# ======================= main =======================

if __name__ == "__main__":
    key = jax.random.PRNGKey(0)
    kx, _ = jax.random.split(key)

    x = jax.random.normal(kx, (B, T, IN_DIM), jnp.float32)
    mask = jnp.zeros((B, T), bool).at[1, T - 5:].set(True)   # pad last 5 frames of item 1
    params = init_params(jax.random.PRNGKey(42))

    w = jax.jit(mel_style_encoder_forward)(x, mask, params)
    w = jax.block_until_ready(w)

    with jax.default_matmul_precision("float32"):
        w_ref = reference_forward(x, mask, params)

    assert w.shape == (B, OUT_DIM)
    if not jnp.allclose(w, w_ref, atol=2e-2, rtol=2e-2):
        raise RuntimeError("Pallas kernel output does not match JAX reference")

    print("KERNEL_OK")
</pallas_src>

<mosaic_0001>
module attributes {stable_mosaic.version = 11 : i64} {
  func.func @_mel_style_kernel(%arg0: memref<32x16xf32, #tpu.memory_space<vmem>>, %arg1: memref<2x16xf32, #tpu.memory_space<vmem>>, %arg2: memref<32x1xf32, #tpu.memory_space<vmem>>, %arg3: memref<2x32xf32, #tpu.memory_space<vmem>>, %arg4: memref<16x16xf32, #tpu.memory_space<vmem>>, %arg5: memref<1x16xf32, #tpu.memory_space<vmem>>, %arg6: memref<16x16xf32, #tpu.memory_space<vmem>>, %arg7: memref<1x16xf32, #tpu.memory_space<vmem>>, %arg8: memref<80x32xf32, #tpu.memory_space<vmem>>, %arg9: memref<1x32xf32, #tpu.memory_space<vmem>>, %arg10: memref<80x32xf32, #tpu.memory_space<vmem>>, %arg11: memref<1x32xf32, #tpu.memory_space<vmem>>, %arg12: memref<16x48xf32, #tpu.memory_space<vmem>>, %arg13: memref<1x48xf32, #tpu.memory_space<vmem>>, %arg14: memref<16x16xf32, #tpu.memory_space<vmem>>, %arg15: memref<1x16xf32, #tpu.memory_space<vmem>>, %arg16: memref<16x8xf32, #tpu.memory_space<vmem>>, %arg17: memref<1x8xf32, #tpu.memory_space<vmem>>, %arg18: memref<2x8xf32, #tpu.memory_space<vmem>>, %arg19: memref<2x20x16xf32, #tpu.memory_space<vmem>>) attributes {dimension_semantics = [], scalar_prefetch = 0 : i64, scratch_operands = 1 : i64, tpu.core_type = #tpu.core_type<tc>} {
    %cst = arith.constant 0.000000e+00 : f32
    %0 = vector.broadcast %cst : f32 to vector<2x2x16xf32>
    %c0 = arith.constant 0 : index
    %c0_0 = arith.constant 0 : index
    %c0_1 = arith.constant 0 : index
    %1 = vector.load %arg19[%c0, %c0_0, %c0_1] : memref<2x20x16xf32, #tpu.memory_space<vmem>>, vector<2x2x16xf32>
    tpu.vector_store %arg19[%c0, %c0_0, %c0_1], %0 {strides = array<i32>} : memref<2x20x16xf32, #tpu.memory_space<vmem>>, vector<2x2x16xf32>,
    %cst_2 = arith.constant 0.000000e+00 : f32
    %2 = vector.broadcast %cst_2 : f32 to vector<2x2x16xf32>
    %c0_3 = arith.constant 0 : index
    %c18 = arith.constant 18 : index
    %c0_4 = arith.constant 0 : index
    %3 = vector.load %arg19[%c0_3, %c18, %c0_4] : memref<2x20x16xf32, #tpu.memory_space<vmem>>, vector<2x2x16xf32>
    tpu.vector_store %arg19[%c0_3, %c18, %c0_4], %2 {strides = array<i32>} : memref<2x20x16xf32, #tpu.memory_space<vmem>>, vector<2x2x16xf32>,
    %c0_5 = arith.constant 0 : index
    %c0_6 = arith.constant 0 : index
    %4 = vector.load %arg0[%c0_5, %c0_6] : memref<32x16xf32, #tpu.memory_space<vmem>>, vector<32x16xf32>
    %c0_7 = arith.constant 0 : index
    %c0_8 = arith.constant 0 : index
    %5 = vector.load %arg4[%c0_7, %c0_8] : memref<16x16xf32, #tpu.memory_space<vmem>>, vector<16x16xf32>
    %cst_9 = arith.constant dense<0.000000e+00> : vector<32x16xf32>
    %6 = tpu.matmul %4, %5, %cst_9 {dimension_numbers = #tpu.dot_dimension_numbers<[1], [0], [0], [1], [0, 0, 1, 1], [], []>} : vector<32x16xf32>, vector<16x16xf32>, vector<32x16xf32> -> vector<32x16xf32>
    %c0_10 = arith.constant 0 : index
    %c0_11 = arith.constant 0 : index
    %7 = vector.load %arg5[%c0_10, %c0_11] : memref<1x16xf32, #tpu.memory_space<vmem>>, vector<1x16xf32>
    %8 = vector.broadcast %7 : vector<1x16xf32> to vector<32x16xf32>
    %9 = arith.addf %6, %8 : vector<32x16xf32>
    %cst_12 = arith.constant 0.000000e+00 : f32
    %10 = vector.broadcast %cst_12 : f32 to vector<32x16xf32>
    %11 = arith.maximumf %9, %10 : vector<32x16xf32>
    %12 = math.absf %9 : vector<32x16xf32>
    %cst_13 = arith.constant 0.000000e+00 : f32
    %13 = vector.broadcast %cst_13 : f32 to vector<32x16xf32>
    %14 = arith.subf %13, %12 : vector<32x16xf32>
    %15 = math.exp %14 : vector<32x16xf32>
    %16 = math.log1p %15 : vector<32x16xf32>
    %17 = arith.addf %11, %16 : vector<32x16xf32>
    %18 = math.tanh %17 : vector<32x16xf32>
    %19 = arith.mulf %9, %18 : vector<32x16xf32>
    %c0_14 = arith.constant 0 : index
    %c0_15 = arith.constant 0 : index
    %20 = vector.load %arg6[%c0_14, %c0_15] : memref<16x16xf32, #tpu.memory_space<vmem>>, vector<16x16xf32>
    %cst_16 = arith.constant dense<0.000000e+00> : vector<32x16xf32>
    %21 = tpu.matmul %19, %20, %cst_16 {dimension_numbers = #tpu.dot_dimension_numbers<[1], [0], [0], [1], [0, 0, 1, 1], [], []>} : vector<32x16xf32>, vector<16x16xf32>, vector<32x16xf32> -> vector<32x16xf32>
    %c0_17 = arith.constant 0 : index
    %c0_18 = arith.constant 0 : index
    %22 = vector.load %arg7[%c0_17, %c0_18] : memref<1x16xf32, #tpu.memory_space<vmem>>, vector<1x16xf32>
    %23 = vector.broadcast %22 : vector<1x16xf32> to vector<32x16xf32>
    %24 = arith.addf %21, %23 : vector<32x16xf32>
    %cst_19 = arith.constant 0.000000e+00 : f32
    %25 = vector.broadcast %cst_19 : f32 to vector<32x16xf32>
    %26 = arith.maximumf %24, %25 : vector<32x16xf32>
    %27 = math.absf %24 : vector<32x16xf32>
    %cst_20 = arith.constant 0.000000e+00 : f32
    %28 = vector.broadcast %cst_20 : f32 to vector<32x16xf32>
    %29 = arith.subf %28, %27 : vector<32x16xf32>
    %30 = math.exp %29 : vector<32x16xf32>
    %31 = math.log1p %30 : vector<32x16xf32>
    %32 = arith.addf %26, %31 : vector<32x16xf32>
    %33 = math.tanh %32 : vector<32x16xf32>
    %34 = arith.mulf %24, %33 : vector<32x16xf32>
    %35 = vector.shape_cast %34 : vector<32x16xf32> to vector<2x16x16xf32>
    %c0_21 = arith.constant 0 : index
    %c2 = arith.constant 2 : index
    %c0_22 = arith.constant 0 : index
    %36 = vector.load %arg19[%c0_21, %c2, %c0_22] : memref<2x20x16xf32, #tpu.memory_space<vmem>>, vector<2x16x16xf32>
    tpu.vector_store %arg19[%c0_21, %c2, %c0_22], %35 {strides = array<i32>} : memref<2x20x16xf32, #tpu.memory_space<vmem>>, vector<2x16x16xf32>,
    %c0_23 = arith.constant 0 : index
    %c0_24 = arith.constant 0 : index
    %c0_25 = arith.constant 0 : index
    %37 = vector.load %arg19[%c0_23, %c0_24, %c0_25] : memref<2x20x16xf32, #tpu.memory_space<vmem>>, vector<2x16x16xf32>
    %c0_26 = arith.constant 0 : index
    %c1 = arith.constant 1 : index
    %c0_27 = arith.constant 0 : index
    %38 = vector.load %arg19[%c0_26, %c1, %c0_27] : memref<2x20x16xf32, #tpu.memory_space<vmem>>, vector<2x16x16xf32>
    %c0_28 = arith.constant 0 : index
    %c2_29 = arith.constant 2 : index
    %c0_30 = arith.constant 0 : index
    %39 = vector.load %arg19[%c0_28, %c2_29, %c0_30] : memref<2x20x16xf32, #tpu.memory_space<vmem>>, vector<2x16x16xf32>
    %c0_31 = arith.constant 0 : index
    %c3 = arith.constant 3 : index
    %c0_32 = arith.constant 0 : index
    %40 = vector.load %arg19[%c0_31, %c3, %c0_32] : memref<2x20x16xf32, #tpu.memory_space<vmem>>, vector<2x16x16xf32>
    %c0_33 = arith.constant 0 : index
    %c4 = arith.constant 4 : index
    %c0_34 = arith.constant 0 : index
    %41 = vector.load %arg19[%c0_33, %c4, %c0_34] : memref<2x20x16xf32, #tpu.memory_space<vmem>>, vector<2x16x16xf32>
    %42 = tpu.concatenate %37, %38, %39, %40, %41 in 2 : vector<2x16x16xf32>, vector<2x16x16xf32>, vector<2x16x16xf32>, vector<2x16x16xf32>, vector<2x16x16xf32> -> vector<2x16x80xf32>
    %43 = vector.shape_cast %42 : vector<2x16x80xf32> to vector<32x80xf32>
    %c0_35 = arith.constant 0 : index
    %c0_36 = arith.constant 0 : index
    %44 = vector.load %arg8[%c0_35, %c0_36] : memref<80x32xf32, #tpu.memory_space<vmem>>, vector<80x32xf32>
    %cst_37 = arith.constant dense<0.000000e+00> : vector<32x32xf32>
    %45 = tpu.matmul %43, %44, %cst_37 {dimension_numbers = #tpu.dot_dimension_numbers<[1], [0], [0], [1], [0, 0, 1, 1], [], []>} : vector<32x80xf32>, vector<80x32xf32>, vector<32x32xf32> -> vector<32x32xf32>
    %c0_38 = arith.constant 0 : index
    %c0_39 = arith.constant 0 : index
    %46 = vector.load %arg9[%c0_38, %c0_39] : memref<1x32xf32, #tpu.memory_space<vmem>>, vector<1x32xf32>
    %47 = vector.broadcast %46 : vector<1x32xf32> to vector<32x32xf32>
    %48 = arith.addf %45, %47 : vector<32x32xf32>
    %49 = vector.extract_strided_slice %48 {offsets = [0, 0], sizes = [32, 16], strides = [1, 1]} : vector<32x32xf32> to vector<32x16xf32>
    %50 = vector.extract_strided_slice %48 {offsets = [0, 16], sizes = [32, 16], strides = [1, 1]} : vector<32x32xf32> to vector<32x16xf32>
    %cst_40 = arith.constant 0.000000e+00 : f32
    %51 = vector.broadcast %cst_40 : f32 to vector<32x16xf32>
    %52 = arith.subf %51, %50 : vector<32x16xf32>
    %53 = math.exp %52 : vector<32x16xf32>
    %cst_41 = arith.constant 1.000000e+00 : f32
    %54 = vector.broadcast %cst_41 : f32 to vector<32x16xf32>
    %55 = arith.addf %54, %53 : vector<32x16xf32>
    %cst_42 = arith.constant 1.000000e+00 : f32
    %56 = vector.broadcast %cst_42 : f32 to vector<32x16xf32>
    %57 = arith.divf %56, %55 : vector<32x16xf32>
    %58 = arith.mulf %49, %57 : vector<32x16xf32>
    %59 = arith.addf %34, %58 : vector<32x16xf32>
    %60 = vector.shape_cast %59 : vector<32x16xf32> to vector<2x16x16xf32>
    %c0_43 = arith.constant 0 : index
    %c2_44 = arith.constant 2 : index
    %c0_45 = arith.constant 0 : index
    %61 = vector.load %arg19[%c0_43, %c2_44, %c0_45] : memref<2x20x16xf32, #tpu.memory_space<vmem>>, vector<2x16x16xf32>
    tpu.vector_store %arg19[%c0_43, %c2_44, %c0_45], %60 {strides = array<i32>} : memref<2x20x16xf32, #tpu.memory_space<vmem>>, vector<2x16x16xf32>,
    %c0_46 = arith.constant 0 : index
    %c0_47 = arith.constant 0 : index
    %c0_48 = arith.constant 0 : index
    %62 = vector.load %arg19[%c0_46, %c0_47, %c0_48] : memref<2x20x16xf32, #tpu.memory_space<vmem>>, vector<2x16x16xf32>
    %c0_49 = arith.constant 0 : index
    %c1_50 = arith.constant 1 : index
    %c0_51 = arith.constant 0 : index
    %63 = vector.load %arg19[%c0_49, %c1_50, %c0_51] : memref<2x20x16xf32, #tpu.memory_space<vmem>>, vector<2x16x16xf32>
    %c0_52 = arith.constant 0 : index
    %c2_53 = arith.constant 2 : index
    %c0_54 = arith.constant 0 : index
    %64 = vector.load %arg19[%c0_52, %c2_53, %c0_54] : memref<2x20x16xf32, #tpu.memory_space<vmem>>, vector<2x16x16xf32>
    %c0_55 = arith.constant 0 : index
    %c3_56 = arith.constant 3 : index
    %c0_57 = arith.constant 0 : index
    %65 = vector.load %arg19[%c0_55, %c3_56, %c0_57] : memref<2x20x16xf32, #tpu.memory_space<vmem>>, vector<2x16x16xf32>
    %c0_58 = arith.constant 0 : index
    %c4_59 = arith.constant 4 : index
    %c0_60 = arith.constant 0 : index
    %66 = vector.load %arg19[%c0_58, %c4_59, %c0_60] : memref<2x20x16xf32, #tpu.memory_space<vmem>>, vector<2x16x16xf32>
    %67 = tpu.concatenate %62, %63, %64, %65, %66 in 2 : vector<2x16x16xf32>, vector<2x16x16xf32>, vector<2x16x16xf32>, vector<2x16x16xf32>, vector<2x16x16xf32> -> vector<2x16x80xf32>
    %68 = vector.shape_cast %67 : vector<2x16x80xf32> to vector<32x80xf32>
    %c0_61 = arith.constant 0 : index
    %c0_62 = arith.constant 0 : index
    %69 = vector.load %arg10[%c0_61, %c0_62] : memref<80x32xf32, #tpu.memory_space<vmem>>, vector<80x32xf32>
    %cst_63 = arith.constant dense<0.000000e+00> : vector<32x32xf32>
    %70 = tpu.matmul %68, %69, %cst_63 {dimension_numbers = #tpu.dot_dimension_numbers<[1], [0], [0], [1], [0, 0, 1, 1], [], []>} : vector<32x80xf32>, vector<80x32xf32>, vector<32x32xf32> -> vector<32x32xf32>
    %c0_64 = arith.constant 0 : index
    %c0_65 = arith.constant 0 : index
    %71 = vector.load %arg11[%c0_64, %c0_65] : memref<1x32xf32, #tpu.memory_space<vmem>>, vector<1x32xf32>
    %72 = vector.broadcast %71 : vector<1x32xf32> to vector<32x32xf32>
    %73 = arith.addf %70, %72 : vector<32x32xf32>
    %74 = vector.extract_strided_slice %73 {offsets = [0, 0], sizes = [32, 16], strides = [1, 1]} : vector<32x32xf32> to vector<32x16xf32>
    %75 = vector.extract_strided_slice %73 {offsets = [0, 16], sizes = [32, 16], strides = [1, 1]} : vector<32x32xf32> to vector<32x16xf32>
    %cst_66 = arith.constant 0.000000e+00 : f32
    %76 = vector.broadcast %cst_66 : f32 to vector<32x16xf32>
    %77 = arith.subf %76, %75 : vector<32x16xf32>
    %78 = math.exp %77 : vector<32x16xf32>
    %cst_67 = arith.constant 1.000000e+00 : f32
    %79 = vector.broadcast %cst_67 : f32 to vector<32x16xf32>
    %80 = arith.addf %79, %78 : vector<32x16xf32>
    %cst_68 = arith.constant 1.000000e+00 : f32
    %81 = vector.broadcast %cst_68 : f32 to vector<32x16xf32>
    %82 = arith.divf %81, %80 : vector<32x16xf32>
    %83 = arith.mulf %74, %82 : vector<32x16xf32>
    %84 = arith.addf %59, %83 : vector<32x16xf32>
    %c0_69 = arith.constant 0 : index
    %c0_70 = arith.constant 0 : index
    %85 = vector.load %arg2[%c0_69, %c0_70] : memref<32x1xf32, #tpu.memory_space<vmem>>, vector<32x1xf32>
    %86 = vector.broadcast %85 : vector<32x1xf32> to vector<32x16xf32>
    %87 = arith.mulf %84, %86 : vector<32x16xf32>
    %c0_71 = arith.constant 0 : index
    %c0_72 = arith.constant 0 : index
    %88 = vector.load %arg12[%c0_71, %c0_72] : memref<16x48xf32, #tpu.memory_space<vmem>>, vector<16x48xf32>
    %cst_73 = arith.constant dense<0.000000e+00> : vector<32x48xf32>
    %89 = tpu.matmul %87, %88, %cst_73 {dimension_numbers = #tpu.dot_dimension_numbers<[1], [0], [0], [1], [0, 0, 1, 1], [], []>} : vector<32x16xf32>, vector<16x48xf32>, vector<32x48xf32> -> vector<32x48xf32>
    %c0_74 = arith.constant 0 : index
    %c0_75 = arith.constant 0 : index
    %90 = vector.load %arg13[%c0_74, %c0_75] : memref<1x48xf32, #tpu.memory_space<vmem>>, vector<1x48xf32>
    %91 = vector.broadcast %90 : vector<1x48xf32> to vector<32x48xf32>
    %92 = arith.addf %89, %91 : vector<32x48xf32>
    %93 = vector.extract_strided_slice %92 {offsets = [0, 0], sizes = [16, 48], strides = [1, 1]} : vector<32x48xf32> to vector<16x48xf32>
    %c0_76 = arith.constant 0 : index
    %c0_77 = arith.constant 0 : index
    %94 = vector.load %arg1[%c0_76, %c0_77] : memref<2x16xf32, #tpu.memory_space<vmem>>, vector<1x16xf32>
    %cst_78 = arith.constant -1.000000e+09 : f32
    %95 = vector.broadcast %cst_78 : f32 to vector<1x16xf32>
    %96 = arith.mulf %94, %95 : vector<1x16xf32>
    %97 = vector.extract_strided_slice %93 {offsets = [0, 0], sizes = [16, 8], strides = [1, 1]} : vector<16x48xf32> to vector<16x8xf32>
    %98 = vector.extract_strided_slice %93 {offsets = [0, 16], sizes = [16, 8], strides = [1, 1]} : vector<16x48xf32> to vector<16x8xf32>
    %99 = vector.extract_strided_slice %93 {offsets = [0, 32], sizes = [16, 8], strides = [1, 1]} : vector<16x48xf32> to vector<16x8xf32>
    %100 = tpu.transpose %98, [1, 0] : vector<16x8xf32> -> vector<8x16xf32>
    %cst_79 = arith.constant dense<0.000000e+00> : vector<16x16xf32>
    %101 = tpu.matmul %97, %100, %cst_79 {dimension_numbers = #tpu.dot_dimension_numbers<[1], [0], [0], [1], [0, 0, 1, 1], [], []>} : vector<16x8xf32>, vector<8x16xf32>, vector<16x16xf32> -> vector<16x16xf32>
    %cst_80 = arith.constant 2.500000e-01 : f32
    %102 = vector.broadcast %cst_80 : f32 to vector<16x16xf32>
    %103 = arith.mulf %101, %102 : vector<16x16xf32>
    %104 = vector.broadcast %96 : vector<1x16xf32> to vector<16x16xf32>
    %105 = arith.addf %103, %104 : vector<16x16xf32>
    %cst_81 = arith.constant dense<0xFF800000> : vector<16xf32>
    %106 = vector.multi_reduction <maximumf>, %105, %cst_81 [1] : vector<16x16xf32> to vector<16xf32>
    %107 = vector.shape_cast %106 : vector<16xf32> to vector<16x1xf32>
    %108 = vector.broadcast %107 : vector<16x1xf32> to vector<16x16xf32>
    %109 = arith.subf %105, %108 : vector<16x16xf32>
    %110 = math.exp %109 : vector<16x16xf32>
    %cst_82 = arith.constant dense<0.000000e+00> : vector<16xf32>
    %111 = vector.multi_reduction <add>, %110, %cst_82 [1] : vector<16x16xf32> to vector<16xf32>
    %112 = vector.shape_cast %111 : vector<16xf32> to vector<16x1xf32>
    %113 = tpu.reciprocal %112 {approx = true} : vector<16x1xf32> -> vector<16x1xf32>
    %114 = vector.broadcast %113 : vector<16x1xf32> to vector<16x16xf32>
    %115 = arith.mulf %110, %114 : vector<16x16xf32>
    %cst_83 = arith.constant dense<0.000000e+00> : vector<16x8xf32>
    %116 = tpu.matmul %115, %99, %cst_83 {dimension_numbers = #tpu.dot_dimension_numbers<[1], [0], [0], [1], [0, 0, 1, 1], [], []>} : vector<16x16xf32>, vector<16x8xf32>, vector<16x8xf32> -> vector<16x8xf32>
    %117 = vector.extract_strided_slice %93 {offsets = [0, 8], sizes = [16, 8], strides = [1, 1]} : vector<16x48xf32> to vector<16x8xf32>
    %118 = vector.extract_strided_slice %93 {offsets = [0, 24], sizes = [16, 8], strides = [1, 1]} : vector<16x48xf32> to vector<16x8xf32>
    %119 = vector.extract_strided_slice %93 {offsets = [0, 40], sizes = [16, 8], strides = [1, 1]} : vector<16x48xf32> to vector<16x8xf32>
    %120 = tpu.transpose %118, [1, 0] : vector<16x8xf32> -> vector<8x16xf32>
    %cst_84 = arith.constant dense<0.000000e+00> : vector<16x16xf32>
    %121 = tpu.matmul %117, %120, %cst_84 {dimension_numbers = #tpu.dot_dimension_numbers<[1], [0], [0], [1], [0, 0, 1, 1], [], []>} : vector<16x8xf32>, vector<8x16xf32>, vector<16x16xf32> -> vector<16x16xf32>
    %cst_85 = arith.constant 2.500000e-01 : f32
    %122 = vector.broadcast %cst_85 : f32 to vector<16x16xf32>
    %123 = arith.mulf %121, %122 : vector<16x16xf32>
    %124 = vector.broadcast %96 : vector<1x16xf32> to vector<16x16xf32>
    %125 = arith.addf %123, %124 : vector<16x16xf32>
    %cst_86 = arith.constant dense<0xFF800000> : vector<16xf32>
    %126 = vector.multi_reduction <maximumf>, %125, %cst_86 [1] : vector<16x16xf32> to vector<16xf32>
    %127 = vector.shape_cast %126 : vector<16xf32> to vector<16x1xf32>
    %128 = vector.broadcast %127 : vector<16x1xf32> to vector<16x16xf32>
    %129 = arith.subf %125, %128 : vector<16x16xf32>
    %130 = math.exp %129 : vector<16x16xf32>
    %cst_87 = arith.constant dense<0.000000e+00> : vector<16xf32>
    %131 = vector.multi_reduction <add>, %130, %cst_87 [1] : vector<16x16xf32> to vector<16xf32>
    %132 = vector.shape_cast %131 : vector<16xf32> to vector<16x1xf32>
    %133 = tpu.reciprocal %132 {approx = true} : vector<16x1xf32> -> vector<16x1xf32>
    %134 = vector.broadcast %133 : vector<16x1xf32> to vector<16x16xf32>
    %135 = arith.mulf %130, %134 : vector<16x16xf32>
    %cst_88 = arith.constant dense<0.000000e+00> : vector<16x8xf32>
    %136 = tpu.matmul %135, %119, %cst_88 {dimension_numbers = #tpu.dot_dimension_numbers<[1], [0], [0], [1], [0, 0, 1, 1], [], []>} : vector<16x16xf32>, vector<16x8xf32>, vector<16x8xf32> -> vector<16x8xf32>
    %137 = tpu.concatenate %116, %136 in 1 : vector<16x8xf32>, vector<16x8xf32> -> vector<16x16xf32>
    %138 = vector.extract_strided_slice %92 {offsets = [16, 0], sizes = [16, 48], strides = [1, 1]} : vector<32x48xf32> to vector<16x48xf32>
    %c1_89 = arith.constant 1 : index
    %c0_90 = arith.constant 0 : index
    %139 = vector.load %arg1[%c1_89, %c0_90] : memref<2x16xf32, #tpu.memory_space<vmem>>, vector<1x16xf32>
    %cst_91 = arith.constant -1.000000e+09 : f32
    %140 = vector.broadcast %cst_91 : f32 to vector<1x16xf32>
    %141 = arith.mulf %139, %140 : vector<1x16xf32>
    %142 = vector.extract_strided_slice %138 {offsets = [0, 0], sizes = [16, 8], strides = [1, 1]} : vector<16x48xf32> to vector<16x8xf32>
    %143 = vector.extract_strided_slice %138 {offsets = [0, 16], sizes = [16, 8], strides = [1, 1]} : vector<16x48xf32> to vector<16x8xf32>
    %144 = vector.extract_strided_slice %138 {offsets = [0, 32], sizes = [16, 8], strides = [1, 1]} : vector<16x48xf32> to vector<16x8xf32>
    %145 = tpu.transpose %143, [1, 0] : vector<16x8xf32> -> vector<8x16xf32>
    %cst_92 = arith.constant dense<0.000000e+00> : vector<16x16xf32>
    %146 = tpu.matmul %142, %145, %cst_92 {dimension_numbers = #tpu.dot_dimension_numbers<[1], [0], [0], [1], [0, 0, 1, 1], [], []>} : vector<16x8xf32>, vector<8x16xf32>, vector<16x16xf32> -> vector<16x16xf32>
    %cst_93 = arith.constant 2.500000e-01 : f32
    %147 = vector.broadcast %cst_93 : f32 to vector<16x16xf32>
    %148 = arith.mulf %146, %147 : vector<16x16xf32>
    %149 = vector.broadcast %141 : vector<1x16xf32> to vector<16x16xf32>
    %150 = arith.addf %148, %149 : vector<16x16xf32>
    %cst_94 = arith.constant dense<0xFF800000> : vector<16xf32>
    %151 = vector.multi_reduction <maximumf>, %150, %cst_94 [1] : vector<16x16xf32> to vector<16xf32>
    %152 = vector.shape_cast %151 : vector<16xf32> to vector<16x1xf32>
    %153 = vector.broadcast %152 : vector<16x1xf32> to vector<16x16xf32>
    %154 = arith.subf %150, %153 : vector<16x16xf32>
    %155 = math.exp %154 : vector<16x16xf32>
    %cst_95 = arith.constant dense<0.000000e+00> : vector<16xf32>
    %156 = vector.multi_reduction <add>, %155, %cst_95 [1] : vector<16x16xf32> to vector<16xf32>
    %157 = vector.shape_cast %156 : vector<16xf32> to vector<16x1xf32>
    %158 = tpu.reciprocal %157 {approx = true} : vector<16x1xf32> -> vector<16x1xf32>
    %159 = vector.broadcast %158 : vector<16x1xf32> to vector<16x16xf32>
    %160 = arith.mulf %155, %159 : vector<16x16xf32>
    %cst_96 = arith.constant dense<0.000000e+00> : vector<16x8xf32>
    %161 = tpu.matmul %160, %144, %cst_96 {dimension_numbers = #tpu.dot_dimension_numbers<[1], [0], [0], [1], [0, 0, 1, 1], [], []>} : vector<16x16xf32>, vector<16x8xf32>, vector<16x8xf32> -> vector<16x8xf32>
    %162 = vector.extract_strided_slice %138 {offsets = [0, 8], sizes = [16, 8], strides = [1, 1]} : vector<16x48xf32> to vector<16x8xf32>
    %163 = vector.extract_strided_slice %138 {offsets = [0, 24], sizes = [16, 8], strides = [1, 1]} : vector<16x48xf32> to vector<16x8xf32>
    %164 = vector.extract_strided_slice %138 {offsets = [0, 40], sizes = [16, 8], strides = [1, 1]} : vector<16x48xf32> to vector<16x8xf32>
    %165 = tpu.transpose %163, [1, 0] : vector<16x8xf32> -> vector<8x16xf32>
    %cst_97 = arith.constant dense<0.000000e+00> : vector<16x16xf32>
    %166 = tpu.matmul %162, %165, %cst_97 {dimension_numbers = #tpu.dot_dimension_numbers<[1], [0], [0], [1], [0, 0, 1, 1], [], []>} : vector<16x8xf32>, vector<8x16xf32>, vector<16x16xf32> -> vector<16x16xf32>
    %cst_98 = arith.constant 2.500000e-01 : f32
    %167 = vector.broadcast %cst_98 : f32 to vector<16x16xf32>
    %168 = arith.mulf %166, %167 : vector<16x16xf32>
    %169 = vector.broadcast %141 : vector<1x16xf32> to vector<16x16xf32>
    %170 = arith.addf %168, %169 : vector<16x16xf32>
    %cst_99 = arith.constant dense<0xFF800000> : vector<16xf32>
    %171 = vector.multi_reduction <maximumf>, %170, %cst_99 [1] : vector<16x16xf32> to vector<16xf32>
    %172 = vector.shape_cast %171 : vector<16xf32> to vector<16x1xf32>
    %173 = vector.broadcast %172 : vector<16x1xf32> to vector<16x16xf32>
    %174 = arith.subf %170, %173 : vector<16x16xf32>
    %175 = math.exp %174 : vector<16x16xf32>
    %cst_100 = arith.constant dense<0.000000e+00> : vector<16xf32>
    %176 = vector.multi_reduction <add>, %175, %cst_100 [1] : vector<16x16xf32> to vector<16xf32>
    %177 = vector.shape_cast %176 : vector<16xf32> to vector<16x1xf32>
    %178 = tpu.reciprocal %177 {approx = true} : vector<16x1xf32> -> vector<16x1xf32>
    %179 = vector.broadcast %178 : vector<16x1xf32> to vector<16x16xf32>
    %180 = arith.mulf %175, %179 : vector<16x16xf32>
    %cst_101 = arith.constant dense<0.000000e+00> : vector<16x8xf32>
    %181 = tpu.matmul %180, %164, %cst_101 {dimension_numbers = #tpu.dot_dimension_numbers<[1], [0], [0], [1], [0, 0, 1, 1], [], []>} : vector<16x16xf32>, vector<16x8xf32>, vector<16x8xf32> -> vector<16x8xf32>
    %182 = tpu.concatenate %161, %181 in 1 : vector<16x8xf32>, vector<16x8xf32> -> vector<16x16xf32>
    %183 = tpu.concatenate %137, %182 in 0 : vector<16x16xf32>, vector<16x16xf32> -> vector<32x16xf32>
    %c0_102 = arith.constant 0 : index
    %c0_103 = arith.constant 0 : index
    %184 = vector.load %arg14[%c0_102, %c0_103] : memref<16x16xf32, #tpu.memory_space<vmem>>, vector<16x16xf32>
    %cst_104 = arith.constant dense<0.000000e+00> : vector<32x16xf32>
    %185 = tpu.matmul %183, %184, %cst_104 {dimension_numbers = #tpu.dot_dimension_numbers<[1], [0], [0], [1], [0, 0, 1, 1], [], []>} : vector<32x16xf32>, vector<16x16xf32>, vector<32x16xf32> -> vector<32x16xf32>
    %c0_105 = arith.constant 0 : index
    %c0_106 = arith.constant 0 : index
    %186 = vector.load %arg15[%c0_105, %c0_106] : memref<1x16xf32, #tpu.memory_space<vmem>>, vector<1x16xf32>
    %187 = vector.broadcast %186 : vector<1x16xf32> to vector<32x16xf32>
    %188 = arith.addf %185, %187 : vector<32x16xf32>
    %189 = arith.addf %188, %87 : vector<32x16xf32>
    %c0_107 = arith.constant 0 : index
    %c0_108 = arith.constant 0 : index
    %190 = vector.load %arg16[%c0_107, %c0_108] : memref<16x8xf32, #tpu.memory_space<vmem>>, vector<16x8xf32>
    %cst_109 = arith.constant dense<0.000000e+00> : vector<32x8xf32>
    %191 = tpu.matmul %189, %190, %cst_109 {dimension_numbers = #tpu.dot_dimension_numbers<[1], [0], [0], [1], [0, 0, 1, 1], [], []>} : vector<32x16xf32>, vector<16x8xf32>, vector<32x8xf32> -> vector<32x8xf32>
    %c0_110 = arith.constant 0 : index
    %c0_111 = arith.constant 0 : index
    %192 = vector.load %arg17[%c0_110, %c0_111] : memref<1x8xf32, #tpu.memory_space<vmem>>, vector<1x8xf32>
    %193 = vector.broadcast %192 : vector<1x8xf32> to vector<32x8xf32>
    %194 = arith.addf %191, %193 : vector<32x8xf32>
    %c0_112 = arith.constant 0 : index
    %c0_113 = arith.constant 0 : index
    %195 = vector.load %arg3[%c0_112, %c0_113] : memref<2x32xf32, #tpu.memory_space<vmem>>, vector<2x32xf32>
    %cst_114 = arith.constant dense<0.000000e+00> : vector<2x8xf32>
    %196 = tpu.matmul %195, %194, %cst_114 {dimension_numbers = #tpu.dot_dimension_numbers<[1], [0], [0], [1], [0, 0, 1, 1], [], []>} : vector<2x32xf32>, vector<32x8xf32>, vector<2x8xf32> -> vector<2x8xf32>
    %c0_115 = arith.constant 0 : index
    %c0_116 = arith.constant 0 : index
    %197 = vector.load %arg18[%c0_115, %c0_116] : memref<2x8xf32, #tpu.memory_space<vmem>>, vector<2x8xf32>
    tpu.vector_store %arg18[%c0_115, %c0_116], %196 {strides = array<i32>} : memref<2x8xf32, #tpu.memory_space<vmem>>, vector<2x8xf32>,
    return
  }
}

</mosaic_0001>

<llo_original>
// kernel: mel_style_encoder_forward.1
$region0: #{mel_style_encoder_forward.1}
  #allocation0 [shape = 'u32[]', space=smem, size = 0x4, offset = 0x4, fixed_abs, tag = 'smem constant byte address 0x4 - core index']
  #allocation1 [shape = 'u32[144,128]{1,0:T(1,128)}', space=vmem, size = 0x12000, scoped, tag = 'internal scratch']
  #allocation2 [shape = 'f32[2,20,16]{2,1,0:T(8,128)}', space=vmem, size = 0x6000, scoped, tag = 'scratch operand']
  %s0 = inlined_call_operand.hbm [shape: f32[32,16], index: 0, kind: input, shape index: {}]
  %s1 = inlined_call_operand.vmem [shape: f32[2,16], index: 1, kind: input, shape index: {}]
  %s2 = inlined_call_operand.vmem [shape: f32[32,1], index: 2, kind: input, shape index: {}]
  %s3 = inlined_call_operand.vmem [shape: f32[2,32], index: 3, kind: input, shape index: {}]
  %s4 = inlined_call_operand.hbm [shape: f32[16,16], index: 4, kind: input, shape index: {}]
  %s5 = inlined_call_operand.hbm [shape: f32[1,16], index: 5, kind: input, shape index: {}]
  %s6 = inlined_call_operand.hbm [shape: f32[16,16], index: 6, kind: input, shape index: {}]
  %s7 = inlined_call_operand.hbm [shape: f32[1,16], index: 7, kind: input, shape index: {}]
  %s8 = inlined_call_operand.vmem [shape: f32[80,32], index: 8, kind: input, shape index: {}]
  %s9 = inlined_call_operand.hbm [shape: f32[1,32], index: 9, kind: input, shape index: {}]
  %s10 = inlined_call_operand.vmem [shape: f32[80,32], index: 10, kind: input, shape index: {}]
  %s11 = inlined_call_operand.hbm [shape: f32[1,32], index: 11, kind: input, shape index: {}]
  %s12 = inlined_call_operand.vmem [shape: f32[16,48], index: 12, kind: input, shape index: {}]
  %s13 = inlined_call_operand.vmem [shape: f32[1,48], index: 13, kind: input, shape index: {}]
  %s14 = inlined_call_operand.hbm [shape: f32[16,16], index: 14, kind: input, shape index: {}]
  %s15 = inlined_call_operand.hbm [shape: f32[1,16], index: 15, kind: input, shape index: {}]
  %s16 = inlined_call_operand.vmem [shape: f32[16,8], index: 16, kind: input, shape index: {}]
  %s17 = inlined_call_operand.hbm [shape: f32[1,8], index: 17, kind: input, shape index: {}]
  %s18 = inlined_call_operand.hbm [shape: f32[2,8], index: 18, kind: output, shape index: {}]
  %s19 = sld [smem:[#allocation0]]
  $region122: #{mel_style_encoder_forward.1} parent=0
    _
  %s21 = ssub.s32 1, %s19
  %s22 = scalar_select 0, %s21, %s19
  $region1: #{mel_style_encoder_forward.1} parent=0
    #allocation3 [shape = 'u8[16384]{0}', space=vmem, size = 0x4000, scoped, tag = 'input window, operand 0, single buffered']
    #allocation4 [shape = 's32[1]{0}', space=sflag, size = 0x4, scoped, tag = 'scoped memory for mel_style_encoder_forward.1']
    #allocation5 [shape = 's32[1]{0}', space=sflag, size = 0x4, scoped, tag = 'scoped memory for mel_style_encoder_forward.1']
    #allocation6 [shape = 'u8[8192]{0}', space=vmem, size = 0x2000, scoped, tag = 'input window, operand 4, single buffered']
    #allocation7 [shape = 's32[1]{0}', space=sflag, size = 0x4, scoped, tag = 'scoped memory for mel_style_encoder_forward.1']
    #allocation8 [shape = 'u8[512]{0}', space=vmem, size = 0x400, scoped, tag = 'input window, operand 5, single buffered']
    #allocation9 [shape = 'u8[8192]{0}', space=vmem, size = 0x2000, scoped, tag = 'input window, operand 6, single buffered']
    #allocation10 [shape = 's32[1]{0}', space=sflag, size = 0x4, scoped, tag = 'scoped memory for mel_style_encoder_forward.1']
    #allocation11 [shape = 'u8[512]{0}', space=vmem, size = 0x400, scoped, tag = 'input window, operand 7, single buffered']
    #allocation12 [shape = 'u8[512]{0}', space=vmem, size = 0x400, scoped, tag = 'input window, operand 9, single buffered']
    #allocation13 [shape = 's32[1]{0}', space=sflag, size = 0x4, scoped, tag = 'scoped memory for mel_style_encoder_forward.1']
    #allocation14 [shape = 'u8[512]{0}', space=vmem, size = 0x400, scoped, tag = 'input window, operand 11, single buffered']
    #allocation15 [shape = 'u8[8192]{0}', space=vmem, size = 0x2000, scoped, tag = 'input window, operand 14, single buffered']
    #allocation16 [shape = 's32[1]{0}', space=sflag, size = 0x4, scoped, tag = 'scoped memory for mel_style_encoder_forward.1']
    #allocation17 [shape = 'u8[512]{0}', space=vmem, size = 0x400, scoped, tag = 'input window, operand 15, single buffered']
    #allocation18 [shape = 'u8[512]{0}', space=vmem, size = 0x400, scoped, tag = 'input window, operand 17, single buffered']
    #allocation19 [shape = 's32[1]{0}', space=sflag, size = 0x4, scoped, tag = 'scoped memory for mel_style_encoder_forward.1']
    #allocation20 [shape = 'u8[1024]{0}', space=vmem, size = 0x400, scoped, tag = 'output window, operand 0, single buffered']
    %23 = vsyncpa [#allocation4], 0
    %24 = vsyncpa [#allocation7], 0
    %25 = vsyncpa [#allocation10], 0
    %26 = vsyncpa [#allocation13], 0
    %27 = vsyncpa [#allocation16], 0
    %28 = vsyncpa [#allocation19], 0
    %29 = vsyncpa [#allocation5], 0
    // Predicated region
    $region2: #{mel_style_encoder_forward.1} parent=1 // pred_check
      _
    $region3: #{mel_style_encoder_forward.1} parent=1 // pred_check_branch
      %31 = sbr.rel (0) target = $region5
    $region4: #{mel_style_encoder_forward.1} parent=1 // pred_region
      %s33 = ssub.s32 512, 512
      %34 = vsyncadd [#allocation4], %s33
      %s35 = sshll.u32 [#allocation3], 4
      %s36 = int_to_ptr.vmem [resolvable:$true] %s35
      %41 = dma.hbm_to_vmem [thread:$0]  %s0, 512, %s36, [#allocation4], 128, 128, 8
    $region5: #{mel_style_encoder_forward.1} parent=1 // pred_fallthru
      _
    // Predicated region
    $region6: #{mel_style_encoder_forward.1} parent=1 // pred_check
      _
    $region7: #{mel_style_encoder_forward.1} parent=1 // pred_check_branch
      %43 = sbr.rel (0) target = $region9
    $region8: #{mel_style_encoder_forward.1} parent=1 // pred_region
      _
    $region9: #{mel_style_encoder_forward.1} parent=1 // pred_fallthru
      _
    // Predicated region
    $region10: #{mel_style_encoder_forward.1} parent=1 // pred_check
      _
    $region11: #{mel_style_encoder_forward.1} parent=1 // pred_check_branch
      %45 = sbr.rel (0) target = $region13
    $region12: #{mel_style_encoder_forward.1} parent=1 // pred_region
      _
    $region13: #{mel_style_encoder_forward.1} parent=1 // pred_fallthru
      _
    // Predicated region
    $region14: #{mel_style_encoder_forward.1} parent=1 // pred_check
      _
    $region15: #{mel_style_encoder_forward.1} parent=1 // pred_check_branch
      %47 = sbr.rel (0) target = $region17
    $region16: #{mel_style_encoder_forward.1} parent=1 // pred_region
      _
    $region17: #{mel_style_encoder_forward.1} parent=1 // pred_fallthru
      _
    // Predicated region
    $region18: #{mel_style_encoder_forward.1} parent=1 // pred_check
      _
    $region19: #{mel_style_encoder_forward.1} parent=1 // pred_check_branch
      %49 = sbr.rel (0) target = $region21
    $region20: #{mel_style_encoder_forward.1} parent=1 // pred_region
      %s51 = ssub.s32 256, 256
      %52 = vsyncadd [#allocation7], %s51
      %s53 = sshll.u32 [#allocation6], 4
      %s54 = int_to_ptr.vmem [resolvable:$true] %s53
      %59 = dma.hbm_to_vmem [thread:$0]  %s4, 256, %s54, [#allocation7], 128, 128, 8
    $region21: #{mel_style_encoder_forward.1} parent=1 // pred_fallthru
      _
    // Predicated region
    $region22: #{mel_style_encoder_forward.1} parent=1 // pred_check
      _
    $region23: #{mel_style_encoder_forward.1} parent=1 // pred_check_branch
      %61 = sbr.rel (0) target = $region25
    $region24: #{mel_style_encoder_forward.1} parent=1 // pred_region
      %s63 = ssub.s32 16, 16
      %64 = vsyncadd [#allocation7], %s63
      %s66 = sshll.u32 [#allocation8], 4
      %s67 = int_to_ptr.vmem [resolvable:$true] %s66
      %69 = dma.hbm_to_vmem [thread:$0]  %s5, 16, %s67, [#allocation7]
    $region25: #{mel_style_encoder_forward.1} parent=1 // pred_fallthru
      _
    // Predicated region
    $region26: #{mel_style_encoder_forward.1} parent=1 // pred_check
      _
    $region27: #{mel_style_encoder_forward.1} parent=1 // pred_check_branch
      %71 = sbr.rel (0) target = $region29
    $region28: #{mel_style_encoder_forward.1} parent=1 // pred_region
      %s73 = ssub.s32 256, 256
      %74 = vsyncadd [#allocation10], %s73
      %s75 = sshll.u32 [#allocation9], 4
      %s76 = int_to_ptr.vmem [resolvable:$true] %s75
      %81 = dma.hbm_to_vmem [thread:$0]  %s6, 256, %s76, [#allocation10], 128, 128, 8
    $region29: #{mel_style_encoder_forward.1} parent=1 // pred_fallthru
      _
    // Predicated region
    $region30: #{mel_style_encoder_forward.1} parent=1 // pred_check
      _
    $region31: #{mel_style_encoder_forward.1} parent=1 // pred_check_branch
      %83 = sbr.rel (0) target = $region33
    $region32: #{mel_style_encoder_forward.1} parent=1 // pred_region
      %s85 = ssub.s32 16, 16
      %86 = vsyncadd [#allocation10], %s85
      %s88 = sshll.u32 [#allocation11], 4
      %s89 = int_to_ptr.vmem [resolvable:$true] %s88
      %91 = dma.hbm_to_vmem [thread:$0]  %s7, 16, %s89, [#allocation10]
    $region33: #{mel_style_encoder_forward.1} parent=1 // pred_fallthru
      _
    // Predicated region
    $region34: #{mel_style_encoder_forward.1} parent=1 // pred_check
      _
    $region35: #{mel_style_encoder_forward.1} parent=1 // pred_check_branch
      %93 = sbr.rel (0) target = $region37
    $region36: #{mel_style_encoder_forward.1} parent=1 // pred_region
      _
    $region37: #{mel_style_encoder_forward.1} parent=1 // pred_fallthru
      _
    // Predicated region
    $region38: #{mel_style_encoder_forward.1} parent=1 // pred_check
      _
    $region39: #{mel_style_encoder_forward.1} parent=1 // pred_check_branch
      %95 = sbr.rel (0) target = $region41
    $region40: #{mel_style_encoder_forward.1} parent=1 // pred_region
      %s97 = ssub.s32 16, 16
      %98 = vsyncadd [#allocation13], %s97
      %s100 = sshll.u32 [#allocation12], 4
      %s101 = int_to_ptr.vmem [resolvable:$true] %s100
      %103 = dma.hbm_to_vmem [thread:$0]  %s9, 16, %s101, [#allocation13]
    $region41: #{mel_style_encoder_forward.1} parent=1 // pred_fallthru
      _
    // Predicated region
    $region42: #{mel_style_encoder_forward.1} parent=1 // pred_check
      _
    $region43: #{mel_style_encoder_forward.1} parent=1 // pred_check_branch
      %105 = sbr.rel (0) target = $region45
    $region44: #{mel_style_encoder_forward.1} parent=1 // pred_region
      _
    $region45: #{mel_style_encoder_forward.1} parent=1 // pred_fallthru
      _
    // Predicated region
    $region46: #{mel_style_encoder_forward.1} parent=1 // pred_check
      _
    $region47: #{mel_style_encoder_forward.1} parent=1 // pred_check_branch
      %107 = sbr.rel (0) target = $region49
    $region48: #{mel_style_encoder_forward.1} parent=1 // pred_region
      %s109 = ssub.s32 16, 16
      %110 = vsyncadd [#allocation13], %s109
      %s112 = sshll.u32 [#allocation14], 4
      %s113 = int_to_ptr.vmem [resolvable:$true] %s112
      %115 = dma.hbm_to_vmem [thread:$0]  %s11, 16, %s113, [#allocation13]
    $region49: #{mel_style_encoder_forward.1} parent=1 // pred_fallthru
      _
    // Predicated region
    $region50: #{mel_style_encoder_forward.1} parent=1 // pred_check
      _
    $region51: #{mel_style_encoder_forward.1} parent=1 // pred_check_branch
      %117 = sbr.rel (0) target = $region53
    $region52: #{mel_style_encoder_forward.1} parent=1 // pred_region
      _
    $region53: #{mel_style_encoder_forward.1} parent=1 // pred_fallthru
      _
    // Predicated region
    $region54: #{mel_style_encoder_forward.1} parent=1 // pred_check
      _
    $region55: #{mel_style_encoder_forward.1} parent=1 // pred_check_branch
      %119 = sbr.rel (0) target = $region57
    $region56: #{mel_style_encoder_forward.1} parent=1 // pred_region
      _
    $region57: #{mel_style_encoder_forward.1} parent=1 // pred_fallthru
      _
    // Predicated region
    $region58: #{mel_style_encoder_forward.1} parent=1 // pred_check
      _
    $region59: #{mel_style_encoder_forward.1} parent=1 // pred_check_branch
      %121 = sbr.rel (0) target = $region61
    $region60: #{mel_style_encoder_forward.1} parent=1 // pred_region
      %s123 = ssub.s32 256, 256
      %124 = vsyncadd [#allocation16], %s123
      %s125 = sshll.u32 [#allocation15], 4
      %s126 = int_to_ptr.vmem [resolvable:$true] %s125
      %131 = dma.hbm_to_vmem [thread:$0]  %s14, 256, %s126, [#allocation16], 128, 128, 8
    $region61: #{mel_style_encoder_forward.1} parent=1 // pred_fallthru
      _
    // Predicated region
    $region62: #{mel_style_encoder_forward.1} parent=1 // pred_check
      _
    $region63: #{mel_style_encoder_forward.1} parent=1 // pred_check_branch
      %133 = sbr.rel (0) target = $region65
    $region64: #{mel_style_encoder_forward.1} parent=1 // pred_region
      %s135 = ssub.s32 16, 16
      %136 = vsyncadd [#allocation16], %s135
      %s138 = sshll.u32 [#allocation17], 4
      %s139 = int_to_ptr.vmem [resolvable:$true] %s138
      %141 = dma.hbm_to_vmem [thread:$0]  %s15, 16, %s139, [#allocation16]
    $region65: #{mel_style_encoder_forward.1} parent=1 // pred_fallthru
      _
    // Predicated region
    $region66: #{mel_style_encoder_forward.1} parent=1 // pred_check
      _
    $region67: #{mel_style_encoder_forward.1} parent=1 // pred_check_branch
      %143 = sbr.rel (0) target = $region69
    $region68: #{mel_style_encoder_forward.1} parent=1 // pred_region
      _
    $region69: #{mel_style_encoder_forward.1} parent=1 // pred_fallthru
      _
    // Predicated region
    $region70: #{mel_style_encoder_forward.1} parent=1 // pred_check
      _
    $region71: #{mel_style_encoder_forward.1} parent=1 // pred_check_branch
      %145 = sbr.rel (0) target = $region73
    $region72: #{mel_style_encoder_forward.1} parent=1 // pred_region
      %s147 = ssub.s32 16, 16
      %148 = vsyncadd [#allocation19], %s147
      %s150 = sshll.u32 [#allocation18], 4
      %s151 = int_to_ptr.vmem [resolvable:$true] %s150
      %153 = dma.hbm_to_vmem [thread:$0]  %s17, 16, %s151, [#allocation19]
    $region73: #{mel_style_encoder_forward.1} parent=1 // pred_fallthru
      _
    // Predicated region
    $region74: #{mel_style_encoder_forward.1} parent=1 // pred_check
      _
    $region75: #{mel_style_encoder_forward.1} parent=1 // pred_check_branch
      %155 = sbr.rel (0) target = $region77
    $region76: #{mel_style_encoder_forward.1} parent=1 // pred_region
      %156 = dma.done [#allocation4], 512
    $region77: #{mel_style_encoder_forward.1} parent=1 // pred_fallthru
      _
    // Predicated region
    $region78: #{mel_style_encoder_forward.1} parent=1 // pred_check
      _
    $region79: #{mel_style_encoder_forward.1} parent=1 // pred_check_branch
      %158 = sbr.rel (0) target = $region81
    $region80: #{mel_style_encoder_forward.1} parent=1 // pred_region
      %159 = dma.done [#allocation7], 256
    $region81: #{mel_style_encoder_forward.1} parent=1 // pred_fallthru
      _
    // Predicated region
    $region82: #{mel_style_encoder_forward.1} parent=1 // pred_check
      _
    $region83: #{mel_style_encoder_forward.1} parent=1 // pred_check_branch
      %161 = sbr.rel (0) target = $region85
    $region84: #{mel_style_encoder_forward.1} parent=1 // pred_region
      %162 = dma.done [#allocation7], 16
    $region85: #{mel_style_encoder_forward.1} parent=1 // pred_fallthru
      _
    // Predicated region
    $region86: #{mel_style_encoder_forward.1} parent=1 // pred_check
      _
    $region87: #{mel_style_encoder_forward.1} parent=1 // pred_check_branch
      %164 = sbr.rel (0) target = $region89
    $region88: #{mel_style_encoder_forward.1} parent=1 // pred_region
      %165 = dma.done [#allocation10], 256
    $region89: #{mel_style_encoder_forward.1} parent=1 // pred_fallthru
      _
    // Predicated region
    $region90: #{mel_style_encoder_forward.1} parent=1 // pred_check
      _
    $region91: #{mel_style_encoder_forward.1} parent=1 // pred_check_branch
      %167 = sbr.rel (0) target = $region93
    $region92: #{mel_style_encoder_forward.1} parent=1 // pred_region
      %168 = dma.done [#allocation10], 16
    $region93: #{mel_style_encoder_forward.1} parent=1 // pred_fallthru
      _
    // Predicated region
    $region94: #{mel_style_encoder_forward.1} parent=1 // pred_check
      _
    $region95: #{mel_style_encoder_forward.1} parent=1 // pred_check_branch
      %170 = sbr.rel (0) target = $region97
    $region96: #{mel_style_encoder_forward.1} parent=1 // pred_region
      %171 = dma.done [#allocation13], 16
    $region97: #{mel_style_encoder_forward.1} parent=1 // pred_fallthru
      _
    // Predicated region
    $region98: #{mel_style_encoder_forward.1} parent=1 // pred_check
      _
    $region99: #{mel_style_encoder_forward.1} parent=1 // pred_check_branch
      %173 = sbr.rel (0) target = $region101
    $region100: #{mel_style_encoder_forward.1} parent=1 // pred_region
      %174 = dma.done [#allocation13], 16
    $region101: #{mel_style_encoder_forward.1} parent=1 // pred_fallthru
      _
    // Predicated region
    $region102: #{mel_style_encoder_forward.1} parent=1 // pred_check
      _
    $region103: #{mel_style_encoder_forward.1} parent=1 // pred_check_branch
      %176 = sbr.rel (0) target = $region105
    $region104: #{mel_style_encoder_forward.1} parent=1 // pred_region
      %177 = dma.done [#allocation16], 256
    $region105: #{mel_style_encoder_forward.1} parent=1 // pred_fallthru
      _
    // Predicated region
    $region106: #{mel_style_encoder_forward.1} parent=1 // pred_check
      _
    $region107: #{mel_style_encoder_forward.1} parent=1 // pred_check_branch
      %179 = sbr.rel (0) target = $region109
    $region108: #{mel_style_encoder_forward.1} parent=1 // pred_region
      %180 = dma.done [#allocation16], 16
    $region109: #{mel_style_encoder_forward.1} parent=1 // pred_fallthru
      _
    // Predicated region
    $region110: #{mel_style_encoder_forward.1} parent=1 // pred_check
      _
    $region111: #{mel_style_encoder_forward.1} parent=1 // pred_check_branch
      %182 = sbr.rel (0) target = $region113
    $region112: #{mel_style_encoder_forward.1} parent=1 // pred_region
      %183 = dma.done [#allocation19], 16
    $region113: #{mel_style_encoder_forward.1} parent=1 // pred_fallthru
      _
    %vm184 = vcmask 123904
    %185 = vst.msk [vmem:[#allocation2] sm:$0x3] %vm184, 0.0
    %186 = vst.msk [vmem:[#allocation2 + $0x18] sm:$0x3] %vm184, 0.0
    %187 = vst.msk [vmem:[#allocation2 + $0x12] sm:$0x3] %vm184, 0.0
    %188 = vst.msk [vmem:[#allocation2 + $0x2a] sm:$0x3] %vm184, 0.0
    %v189 = vld [vmem:[#allocation3] sm:$0xff]
    %v190 = vld [vmem:[#allocation3 + $0x8] sm:$0xff]
    %v191 = vld [vmem:[#allocation3 + $0x10] sm:$0xff]
    %v192 = vld [vmem:[#allocation3 + $0x18] sm:$0xff]
    %v193 = vld [vmem:[#allocation6] sm:$0xff]
    %v194 = vld [vmem:[#allocation6 + $0x8] sm:$0xff]
    %v195 = vld [vmem:[#allocation8] sm:$0x1]
    %v197 = vlaneseq
    %v198 = vshrl.u32 %v197, 7
    %v199 = vsub.s32 0, %v198
    %v200 = vrot.slane %v195, %v199
    %vm202 = vcmask 130048
    %v204 = vsel %vm202, %v189, 0
    %v207 = vsel %vm202, %v190, 0
    %v210 = vsel %vm202, %v191, 0
    %v213 = vsel %vm202, %v192, 0
    %215 = vmatprep.subr.mxu0 0.0
    %216 = vmatpush1.msra.mxu0 0.0
    %217 = vmatprep.subr.mxu0 0.0
    %218 = vmatpush1.msra.mxu0 0.0
    %219 = vmatprep.subr.mxu0 0.0
    %220 = vmatpush1.msra.mxu0 0.0
    %221 = vmatprep.subr.mxu0 0.0
    %222 = vmatpush1.msra.mxu0 0.0
    %223 = vmatprep.subr.mxu0 0.0
    %224 = vmatpush1.msra.mxu0 0.0
    %225 = vmatprep.subr.mxu0 0.0
    %226 = vmatpush1.msra.mxu0 0.0
    %227 = vmatprep.subr.mxu0 0.0
    %228 = vmatpush1.msra.mxu0 0.0
    %229 = vmatprep.subr.mxu0 0.0
    %230 = vmatpush1.msra.mxu0 0.0
    %231 = vmatprep.subr.mxu0 0.0
    %232 = vmatpush1.msra.mxu0 0.0
    %233 = vmatprep.subr.mxu0 0.0
    %234 = vmatpush1.msra.mxu0 0.0
    %235 = vmatprep.subr.mxu0 0.0
    %236 = vmatpush1.msra.mxu0 0.0
    %237 = vmatprep.subr.mxu0 0.0
    %238 = vmatpush1.msra.mxu0 0.0
    %239 = vmatprep.subr.mxu0 0.0
    %240 = vmatpush1.msra.mxu0 0.0
    %241 = vmatprep.subr.mxu0 0.0
    %242 = vmatpush1.msra.mxu0 0.0
    %243 = vmatprep.subr.mxu0 0.0
    %244 = vmatpush1.msra.mxu0 %v194
    %245 = vmatprep.subr.mxu0 0.0
    %246 = vmatpush1.msra.mxu0 %v193
    %247 = vmatprep.subr.mxu0 0.0
    %248 = vmatpush2.msra.mxu0 0.0
    %249 = vmatprep.subr.mxu0 0.0
    %250 = vmatpush2.msra.mxu0 0.0
    %251 = vmatprep.subr.mxu0 0.0
    %252 = vmatpush2.msra.mxu0 0.0
    %253 = vmatprep.subr.mxu0 0.0
    %254 = vmatpush2.msra.mxu0 0.0
    %255 = vmatprep.subr.mxu0 0.0
    %256 = vmatpush2.msra.mxu0 0.0
    %257 = vmatprep.subr.mxu0 0.0
    %258 = vmatpush2.msra.mxu0 0.0
    %259 = vmatprep.subr.mxu0 0.0
    %260 = vmatpush2.msra.mxu0 0.0
    %261 = vmatprep.subr.mxu0 0.0
    %262 = vmatpush2.msra.mxu0 0.0
    %263 = vmatprep.subr.mxu0 0.0
    %264 = vmatpush2.msra.mxu0 0.0
    %265 = vmatprep.subr.mxu0 0.0
    %266 = vmatpush2.msra.mxu0 0.0
    %267 = vmatprep.subr.mxu0 0.0
    %268 = vmatpush2.msra.mxu0 0.0
    %269 = vmatprep.subr.mxu0 0.0
    %270 = vmatpush2.msra.mxu0 0.0
    %271 = vmatprep.subr.mxu0 0.0
    %272 = vmatpush2.msra.mxu0 0.0
    %273 = vmatprep.subr.mxu0 0.0
    %274 = vmatpush2.msra.mxu0 0.0
    %275 = vmatprep.subr.mxu0 0.0
    %276 = vmatpush2.msra.mxu0 0.0
    %277 = vmatprep.subr.mxu0 0.0
    %278 = vmatpush2.msra.mxu0 0.0
    %279 = vmatprep.mubr.f32.mxu0 0.0
    %280 = vmatmul.mubr.f32.gmra.mxu0 %v204
    %v281 = vpop.f32.mrf.mxu0
    %v282 = vadd.f32 %v200, %v281
    %v283 = vpop.f32.mrf.mxu0
    %284 = vmatprep.mubr.f32.mxu0 0.0
    %285 = vmatmul.mubr.f32.gmra.mxu0 %v207
    %v286 = vpop.f32.mrf.mxu0
    %v287 = vadd.f32 %v200, %v286
    %v288 = vpop.f32.mrf.mxu0
    %289 = vmatprep.mubr.f32.mxu0 0.0
    %290 = vmatmul.mubr.f32.gmra.mxu0 %v210
    %v291 = vpop.f32.mrf.mxu0
    %v292 = vadd.f32 %v200, %v291
    %v293 = vpop.f32.mrf.mxu0
    %294 = vmatprep.mubr.f32.mxu0 0.0
    %295 = vmatmul.mubr.f32.gmra.mxu0 %v213
    %v296 = vpop.f32.mrf.mxu0
    %v297 = vadd.f32 %v200, %v296
    %v298 = vpop.f32.mrf.mxu0
    %299 = vdwg.mxu0
    %v300 = vmax.f32 %v282, 0.0
    %v301 = vmax.f32 %v287, 0.0
    %v302 = vmax.f32 %v292, 0.0
    %v303 = vmax.f32 %v297, 0.0
    %v304 = vand.u32 2147483647, %v282
    %v305 = vand.u32 2147483647, %v287
    %v306 = vand.u32 2147483647, %v292
    %v307 = vand.u32 2147483647, %v297
    %v308 = vsub.f32 0.0, %v304
    %v309 = vsub.f32 0.0, %v305
    %v310 = vsub.f32 0.0, %v306
    %v311 = vsub.f32 0.0, %v307
    %v312 = vmul.f32 %v308, 1.442695
    %v313 = vpow.pop %v312
    %v314 = vmul.f32 %v309, 1.442695
    %v315 = vpow.pop %v314
    %v316 = vmul.f32 %v310, 1.442695
    %v317 = vpow.pop %v316
    %v318 = vmul.f32 %v311, 1.442695
    %v319 = vpow.pop %v318
    %v320 = vadd.f32 %v313, 1.0
    %v321 = vlog2.pop %v320
    %v322 = vmul.f32 %v321, 0.6931472
    %v323 = vmul.f32 -0.5, %v313
    %v324 = vadd.f32 %v323, 1.0
    %v325 = vmul.f32 %v324, %v313
    %v326 = vand.u32 2147483647, %v313
    %vm327 = vcmp.lt.f32.partialorder %v326, 0.0004427343
    %v328 = vsel %vm327, %v325, %v322
    %v329 = vadd.f32 %v315, 1.0
    %v330 = vlog2.pop %v329
    %v331 = vmul.f32 %v330, 0.6931472
    %v332 = vmul.f32 -0.5, %v315
    %v333 = vadd.f32 %v332, 1.0
    %v334 = vmul.f32 %v333, %v315
    %v335 = vand.u32 2147483647, %v315
    %vm336 = vcmp.lt.f32.partialorder %v335, 0.0004427343
    %v337 = vsel %vm336, %v334, %v331
    %v338 = vadd.f32 %v317, 1.0
    %v339 = vlog2.pop %v338
    %v340 = vmul.f32 %v339, 0.6931472
    %v341 = vmul.f32 -0.5, %v317
    %v342 = vadd.f32 %v341, 1.0
    %v343 = vmul.f32 %v342, %v317
    %v344 = vand.u32 2147483647, %v317
    %vm345 = vcmp.lt.f32.partialorder %v344, 0.0004427343
    %v346 = vsel %vm345, %v343, %v340
    %v347 = vadd.f32 %v319, 1.0
    %v348 = vlog2.pop %v347
    %v349 = vmul.f32 %v348, 0.6931472
    %v350 = vmul.f32 -0.5, %v319
    %v351 = vadd.f32 %v350, 1.0
    %v352 = vmul.f32 %v351, %v319
    %v353 = vand.u32 2147483647, %v319
    %vm354 = vcmp.lt.f32.partialorder %v353, 0.0004427343
    %v355 = vsel %vm354, %v352, %v349
    %v356 = vadd.f32 %v300, %v328
    %v357 = vadd.f32 %v301, %v337
    %v358 = vadd.f32 %v302, %v346
    %v359 = vadd.f32 %v303, %v355
    %v360 = vtanh.pop %v356
    %v361 = vtanh.pop %v357
    %v362 = vtanh.pop %v358
    %v363 = vtanh.pop %v359
    %v364 = vmul.f32 %v282, %v360
    %v365 = vmul.f32 %v287, %v361
    %v366 = vmul.f32 %v292, %v362
    %v367 = vmul.f32 %v297, %v363
    %v368 = vld [vmem:[#allocation9] sm:$0xff]
    %v369 = vld [vmem:[#allocation9 + $0x8] sm:$0xff]
    %v370 = vld [vmem:[#allocation11] sm:$0x1]
    %v372 = vlaneseq
    %v373 = vshrl.u32 %v372, 7
    %v374 = vsub.s32 0, %v373
    %v375 = vrot.slane %v370, %v374
    %v378 = vsel %vm202, %v364, 0
    %v381 = vsel %vm202, %v365, 0
    %v384 = vsel %vm202, %v366, 0
    %v387 = vsel %vm202, %v367, 0
    %389 = vmatprep.subr.mxu0 0.0
    %390 = vmatpush1.msra.mxu0 0.0
    %391 = vmatprep.subr.mxu0 0.0
    %392 = vmatpush1.msra.mxu0 0.0
    %393 = vmatprep.subr.mxu0 0.0
    %394 = vmatpush1.msra.mxu0 0.0
    %395 = vmatprep.subr.mxu0 0.0
    %396 = vmatpush1.msra.mxu0 0.0
    %397 = vmatprep.subr.mxu0 0.0
    %398 = vmatpush1.msra.mxu0 0.0
    %399 = vmatprep.subr.mxu0 0.0
    %400 = vmatpush1.msra.mxu0 0.0
    %401 = vmatprep.subr.mxu0 0.0
    %402 = vmatpush1.msra.mxu0 0.0
    %403 = vmatprep.subr.mxu0 0.0
    %404 = vmatpush1.msra.mxu0 0.0
    %405 = vmatprep.subr.mxu0 0.0
    %406 = vmatpush1.msra.mxu0 0.0
    %407 = vmatprep.subr.mxu0 0.0
    %408 = vmatpush1.msra.mxu0 0.0
    %409 = vmatprep.subr.mxu0 0.0
    %410 = vmatpush1.msra.mxu0 0.0
    %411 = vmatprep.subr.mxu0 0.0
    %412 = vmatpush1.msra.mxu0 0.0
    %413 = vmatprep.subr.mxu0 0.0
    %414 = vmatpush1.msra.mxu0 0.0
    %415 = vmatprep.subr.mxu0 0.0
    %416 = vmatpush1.msra.mxu0 0.0
    %417 = vmatprep.subr.mxu0 0.0
    %418 = vmatpush1.msra.mxu0 %v369
    %419 = vmatprep.subr.mxu0 0.0
    %420 = vmatpush1.msra.mxu0 %v368
    %421 = vmatprep.subr.mxu0 0.0
    %422 = vmatpush2.msra.mxu0 0.0
    %423 = vmatprep.subr.mxu0 0.0
    %424 = vmatpush2.msra.mxu0 0.0
    %425 = vmatprep.subr.mxu0 0.0
    %426 = vmatpush2.msra.mxu0 0.0
    %427 = vmatprep.subr.mxu0 0.0
    %428 = vmatpush2.msra.mxu0 0.0
    %429 = vmatprep.subr.mxu0 0.0
    %430 = vmatpush2.msra.mxu0 0.0
    %431 = vmatprep.subr.mxu0 0.0
    %432 = vmatpush2.msra.mxu0 0.0
    %433 = vmatprep.subr.mxu0 0.0
    %434 = vmatpush2.msra.mxu0 0.0
    %435 = vmatprep.subr.mxu0 0.0
    %436 = vmatpush2.msra.mxu0 0.0
    %437 = vmatprep.subr.mxu0 0.0
    %438 = vmatpush2.msra.mxu0 0.0
    %439 = vmatprep.subr.mxu0 0.0
    %440 = vmatpush2.msra.mxu0 0.0
    %441 = vmatprep.subr.mxu0 0.0
    %442 = vmatpush2.msra.mxu0 0.0
    %443 = vmatprep.subr.mxu0 0.0
    %444 = vmatpush2.msra.mxu0 0.0
    %445 = vmatprep.subr.mxu0 0.0
    %446 = vmatpush2.msra.mxu0 0.0
    %447 = vmatprep.subr.mxu0 0.0
    %448 = vmatpush2.msra.mxu0 0.0
    %449 = vmatprep.subr.mxu0 0.0
    %450 = vmatpush2.msra.mxu0 0.0
    %451 = vmatprep.subr.mxu0 0.0
    %452 = vmatpush2.msra.mxu0 0.0
    %453 = vmatprep.mubr.f32.mxu0 0.0
    %454 = vmatmul.mubr.f32.gmra.mxu0 %v378
    %v455 = vpop.f32.mrf.mxu0
    %v456 = vadd.f32 %v375, %v455
    %v457 = vpop.f32.mrf.mxu0
    %458 = vmatprep.mubr.f32.mxu0 0.0
    %459 = vmatmul.mubr.f32.gmra.mxu0 %v381
    %v460 = vpop.f32.mrf.mxu0
    %v461 = vadd.f32 %v375, %v460
    %v462 = vpop.f32.mrf.mxu0
    %463 = vmatprep.mubr.f32.mxu0 0.0
    %464 = vmatmul.mubr.f32.gmra.mxu0 %v384
    %v465 = vpop.f32.mrf.mxu0
    %v466 = vadd.f32 %v375, %v465
    %v467 = vpop.f32.mrf.mxu0
    %468 = vmatprep.mubr.f32.mxu0 0.0
    %469 = vmatmul.mubr.f32.gmra.mxu0 %v387
    %v470 = vpop.f32.mrf.mxu0
    %v471 = vadd.f32 %v375, %v470
    %v472 = vpop.f32.mrf.mxu0
    %473 = vdwg.mxu0
    %v474 = vmax.f32 %v456, 0.0
    %v475 = vmax.f32 %v461, 0.0
    %v476 = vmax.f32 %v466, 0.0
    %v477 = vmax.f32 %v471, 0.0
    %v478 = vand.u32 2147483647, %v456
    %v479 = vand.u32 2147483647, %v461
    %v480 = vand.u32 2147483647, %v466
    %v481 = vand.u32 2147483647, %v471
    %v482 = vsub.f32 0.0, %v478
    %v483 = vsub.f32 0.0, %v479
    %v484 = vsub.f32 0.0, %v480
    %v485 = vsub.f32 0.0, %v481
    %v486 = vmul.f32 %v482, 1.442695
    %v487 = vpow.pop %v486
    %v488 = vmul.f32 %v483, 1.442695
    %v489 = vpow.pop %v488
    %v490 = vmul.f32 %v484, 1.442695
    %v491 = vpow.pop %v490
    %v492 = vmul.f32 %v485, 1.442695
    %v493 = vpow.pop %v492
    %v494 = vadd.f32 %v487, 1.0
    %v495 = vlog2.pop %v494
    %v496 = vmul.f32 %v495, 0.6931472
    %v497 = vmul.f32 -0.5, %v487
    %v498 = vadd.f32 %v497, 1.0
    %v499 = vmul.f32 %v498, %v487
    %v500 = vand.u32 2147483647, %v487
    %vm501 = vcmp.lt.f32.partialorder %v500, 0.0004427343
    %v502 = vsel %vm501, %v499, %v496
    %v503 = vadd.f32 %v489, 1.0
    %v504 = vlog2.pop %v503
    %v505 = vmul.f32 %v504, 0.6931472
    %v506 = vmul.f32 -0.5, %v489
    %v507 = vadd.f32 %v506, 1.0
    %v508 = vmul.f32 %v507, %v489
    %v509 = vand.u32 2147483647, %v489
    %vm510 = vcmp.lt.f32.partialorder %v509, 0.0004427343
    %v511 = vsel %vm510, %v508, %v505
    %v512 = vadd.f32 %v491, 1.0
    %v513 = vlog2.pop %v512
    %v514 = vmul.f32 %v513, 0.6931472
    %v515 = vmul.f32 -0.5, %v491
    %v516 = vadd.f32 %v515, 1.0
    %v517 = vmul.f32 %v516, %v491
    %v518 = vand.u32 2147483647, %v491
    %vm519 = vcmp.lt.f32.partialorder %v518, 0.0004427343
    %v520 = vsel %vm519, %v517, %v514
    %v521 = vadd.f32 %v493, 1.0
    %v522 = vlog2.pop %v521
    %v523 = vmul.f32 %v522, 0.6931472
    %v524 = vmul.f32 -0.5, %v493
    %v525 = vadd.f32 %v524, 1.0
    %v526 = vmul.f32 %v525, %v493
    %v527 = vand.u32 2147483647, %v493
    %vm528 = vcmp.lt.f32.partialorder %v527, 0.0004427343
    %v529 = vsel %vm528, %v526, %v523
    %v530 = vadd.f32 %v474, %v502
    %v531 = vadd.f32 %v475, %v511
    %v532 = vadd.f32 %v476, %v520
    %v533 = vadd.f32 %v477, %v529
    %v534 = vtanh.pop %v530
    %v535 = vtanh.pop %v531
    %v536 = vtanh.pop %v532
    %v537 = vtanh.pop %v533
    %v538 = vmul.f32 %v456, %v534
    %v539 = vmul.f32 %v461, %v535
    %v540 = vmul.f32 %v466, %v536
    %v541 = vmul.f32 %v471, %v537
    %542 = vst.msk [vmem:[#allocation2 + $0x2] sm:$0xff] %vm202, %v538
    %543 = vst.msk [vmem:[#allocation2 + $0xa] sm:$0xff] %vm202, %v539
    %544 = vst.msk [vmem:[#allocation2 + $0x1a] sm:$0xff] %vm202, %v540
    %545 = vst.msk [vmem:[#allocation2 + $0x22] sm:$0xff] %vm202, %v541
    %v546 = vld [vmem:[#allocation2] sm:$0xff]
    %v547 = vld [vmem:[#allocation2 + $0x8] sm:$0xff]
    %v548 = vld [vmem:[#allocation2 + $0x18] sm:$0xff]
    %v549 = vld [vmem:[#allocation2 + $0x20] sm:$0xff]
    %v550 = vld [vmem:[#allocation2 + $0x1] sm:$0xff]
    %v551 = vld [vmem:[#allocation2 + $0x9] sm:$0xff]
    %v552 = vld [vmem:[#allocation2 + $0x19] sm:$0xff]
    %v553 = vld [vmem:[#allocation2 + $0x21] sm:$0xff]
    %v554 = vld [vmem:[#allocation2 + $0x2] sm:$0xff]
    %v555 = vld [vmem:[#allocation2 + $0xa] sm:$0xff]
    %v556 = vld [vmem:[#allocation2 + $0x1a] sm:$0xff]
    %v557 = vld [vmem:[#allocation2 + $0x22] sm:$0xff]
    %v558 = vld [vmem:[#allocation2 + $0x3] sm:$0xff]
    %v559 = vld [vmem:[#allocation2 + $0xb] sm:$0xff]
    %v560 = vld [vmem:[#allocation2 + $0x1b] sm:$0xff]
    %v561 = vld [vmem:[#allocation2 + $0x23] sm:$0xff]
    %v562 = vld [vmem:[#allocation2 + $0x4] sm:$0xff]
    %v563 = vld [vmem:[#allocation2 + $0xc] sm:$0xff]
    %v564 = vld [vmem:[#allocation2 + $0x1c] sm:$0xff]
    %v565 = vld [vmem:[#allocation2 + $0x24] sm:$0xff]
    %570 = vrot.lane.b32.xlu0 %v550, 16
    %v571 = vpop.permute.xlu0 %570
    %572 = vrot.lane.b32.xlu0 %v551, 16
    %v573 = vpop.permute.xlu0 %572
    %574 = vrot.lane.b32.xlu0 %v552, 16
    %v575 = vpop.permute.xlu0 %574
    %576 = vrot.lane.b32.xlu0 %v553, 16
    %v577 = vpop.permute.xlu0 %576
    %586 = vrot.lane.b32.xlu0 %v554, 32
    %v587 = vpop.permute.xlu0 %586
    %588 = vrot.lane.b32.xlu0 %v555, 32
    %v589 = vpop.permute.xlu0 %588
    %590 = vrot.lane.b32.xlu0 %v556, 32
    %v591 = vpop.permute.xlu0 %590
    %592 = vrot.lane.b32.xlu0 %v557, 32
    %v593 = vpop.permute.xlu0 %592
    %602 = vrot.lane.b32.xlu0 %v558, 48
    %v603 = vpop.permute.xlu0 %602
    %604 = vrot.lane.b32.xlu0 %v559, 48
    %v605 = vpop.permute.xlu0 %604
    %606 = vrot.lane.b32.xlu0 %v560, 48
    %v607 = vpop.permute.xlu0 %606
    %608 = vrot.lane.b32.xlu0 %v561, 48
    %v609 = vpop.permute.xlu0 %608
    %618 = vrot.lane.b32.xlu0 %v562, 64
    %v619 = vpop.permute.xlu0 %618
    %620 = vrot.lane.b32.xlu0 %v563, 64
    %v621 = vpop.permute.xlu0 %620
    %622 = vrot.lane.b32.xlu0 %v564, 64
    %v623 = vpop.permute.xlu0 %622
    %624 = vrot.lane.b32.xlu0 %v565, 64
    %v625 = vpop.permute.xlu0 %624
    %v630 = vsel %vm202, %v546, %v571
    %v631 = vsel %vm202, %v547, %v573
    %v632 = vsel %vm202, %v548, %v575
    %v633 = vsel %vm202, %v549, %v577
    %vm634 = vcmask 261120
    %v635 = vsel %vm634, %v630, %v587
    %v636 = vsel %vm634, %v631, %v589
    %v637 = vsel %vm634, %v632, %v591
    %v638 = vsel %vm634, %v633, %v593
    %vm639 = vcmask 392192
    %v640 = vsel %vm639, %v635, %v603
    %v641 = vsel %vm639, %v636, %v605
    %v642 = vsel %vm639, %v637, %v607
    %v643 = vsel %vm639, %v638, %v609
    %vm644 = vcmask 523264
    %v645 = vsel %vm644, %v640, %v619
    %v646 = vsel %vm644, %v641, %v621
    %v647 = vsel %vm644, %v642, %v623
    %v648 = vsel %vm644, %v643, %v625
    %v649 = vld [vmem:[%s8] sm:$0xff]
    %v650 = vld [vmem:[%s8 + $0x8] sm:$0xff]
    %v651 = vld [vmem:[%s8 + $0x10] sm:$0xff]
    %v652 = vld [vmem:[%s8 + $0x18] sm:$0xff]
    %v653 = vld [vmem:[%s8 + $0x20] sm:$0xff]
    %v654 = vld [vmem:[%s8 + $0x28] sm:$0xff]
    %v655 = vld [vmem:[%s8 + $0x30] sm:$0xff]
    %v656 = vld [vmem:[%s8 + $0x38] sm:$0xff]
    %v657 = vld [vmem:[%s8 + $0x40] sm:$0xff]
    %v658 = vld [vmem:[%s8 + $0x48] sm:$0xff]
    %v659 = vld [vmem:[#allocation12] sm:$0x1]
    %v661 = vlaneseq
    %v662 = vshrl.u32 %v661, 7
    %v663 = vsub.s32 0, %v662
    %v664 = vrot.slane %v659, %v663
    %vm666 = vcmask 654336
    %v668 = vsel %vm666, %v645, 0
    %v671 = vsel %vm666, %v646, 0
    %v674 = vsel %vm666, %v647, 0
    %v677 = vsel %vm666, %v648, 0
    %679 = vmatprep.subr.mxu0 0.0
    %680 = vmatpush1.msra.mxu0 0.0
    %681 = vmatprep.subr.mxu0 0.0
    %682 = vmatpush1.msra.mxu0 0.0
    %683 = vmatprep.subr.mxu0 0.0
    %684 = vmatpush1.msra.mxu0 0.0
    %685 = vmatprep.subr.mxu0 0.0
    %686 = vmatpush1.msra.mxu0 0.0
    %687 = vmatprep.subr.mxu0 0.0
    %688 = vmatpush1.msra.mxu0 0.0
    %689 = vmatprep.subr.mxu0 0.0
    %690 = vmatpush1.msra.mxu0 0.0
    %691 = vmatprep.subr.mxu0 0.0
    %692 = vmatpush1.msra.mxu0 %v658
    %693 = vmatprep.subr.mxu0 0.0
    %694 = vmatpush1.msra.mxu0 %v657
    %695 = vmatprep.subr.mxu0 0.0
    %696 = vmatpush1.msra.mxu0 %v656
    %697 = vmatprep.subr.mxu0 0.0
    %698 = vmatpush1.msra.mxu0 %v655
    %699 = vmatprep.subr.mxu0 0.0
    %700 = vmatpush1.msra.mxu0 %v654
    %701 = vmatprep.subr.mxu0 0.0
    %702 = vmatpush1.msra.mxu0 %v653
    %703 = vmatprep.subr.mxu0 0.0
    %704 = vmatpush1.msra.mxu0 %v652
    %705 = vmatprep.subr.mxu0 0.0
    %706 = vmatpush1.msra.mxu0 %v651
    %707 = vmatprep.subr.mxu0 0.0
    %708 = vmatpush1.msra.mxu0 %v650
    %709 = vmatprep.subr.mxu0 0.0
    %710 = vmatpush1.msra.mxu0 %v649
    %711 = vmatprep.subr.mxu0 0.0
    %712 = vmatpush2.msra.mxu0 0.0
    %713 = vmatprep.subr.mxu0 0.0
    %714 = vmatpush2.msra.mxu0 0.0
    %715 = vmatprep.subr.mxu0 0.0
    %716 = vmatpush2.msra.mxu0 0.0
    %717 = vmatprep.subr.mxu0 0.0
    %718 = vmatpush2.msra.mxu0 0.0
    %719 = vmatprep.subr.mxu0 0.0
    %720 = vmatpush2.msra.mxu0 0.0
    %721 = vmatprep.subr.mxu0 0.0
    %722 = vmatpush2.msra.mxu0 0.0
    %723 = vmatprep.subr.mxu0 0.0
    %724 = vmatpush2.msra.mxu0 0.0
    %725 = vmatprep.subr.mxu0 0.0
    %726 = vmatpush2.msra.mxu0 0.0
    %727 = vmatprep.subr.mxu0 0.0
    %728 = vmatpush2.msra.mxu0 0.0
    %729 = vmatprep.subr.mxu0 0.0
    %730 = vmatpush2.msra.mxu0 0.0
    %731 = vmatprep.subr.mxu0 0.0
    %732 = vmatpush2.msra.mxu0 0.0
    %733 = vmatprep.subr.mxu0 0.0
    %734 = vmatpush2.msra.mxu0 0.0
    %735 = vmatprep.subr.mxu0 0.0
    %736 = vmatpush2.msra.mxu0 0.0
    %737 = vmatprep.subr.mxu0 0.0
    %738 = vmatpush2.msra.mxu0 0.0
    %739 = vmatprep.subr.mxu0 0.0
    %740 = vmatpush2.msra.mxu0 0.0
    %741 = vmatprep.subr.mxu0 0.0
    %742 = vmatpush2.msra.mxu0 0.0
    %743 = vmatprep.mubr.f32.mxu0 0.0
    %744 = vmatmul.mubr.f32.gmra.mxu0 %v668
    %v745 = vpop.f32.mrf.mxu0
    %v746 = vadd.f32 %v664, %v745
    %v747 = vpop.f32.mrf.mxu0
    %748 = vmatprep.mubr.f32.mxu0 0.0
    %749 = vmatmul.mubr.f32.gmra.mxu0 %v671
    %v750 = vpop.f32.mrf.mxu0
    %v751 = vadd.f32 %v664, %v750
    %v752 = vpop.f32.mrf.mxu0
    %753 = vmatprep.mubr.f32.mxu0 0.0
    %754 = vmatmul.mubr.f32.gmra.mxu0 %v674
    %v755 = vpop.f32.mrf.mxu0
    %v756 = vadd.f32 %v664, %v755
    %v757 = vpop.f32.mrf.mxu0
    %758 = vmatprep.mubr.f32.mxu0 0.0
    %759 = vmatmul.mubr.f32.gmra.mxu0 %v677
    %v760 = vpop.f32.mrf.mxu0
    %v761 = vadd.f32 %v664, %v760
    %v762 = vpop.f32.mrf.mxu0
    %763 = vdwg.mxu0
    %v764 = vsub.f32 0.0, %v746
    %v765 = vsub.f32 0.0, %v751
    %v766 = vsub.f32 0.0, %v756
    %v767 = vsub.f32 0.0, %v761
    %v768 = vmul.f32 %v764, 1.442695
    %v769 = vpow.pop %v768
    %v770 = vmul.f32 %v765, 1.442695
    %v771 = vpow.pop %v770
    %v772 = vmul.f32 %v766, 1.442695
    %v773 = vpow.pop %v772
    %v774 = vmul.f32 %v767, 1.442695
    %v775 = vpow.pop %v774
    %v776 = vadd.f32 %v769, 1.0
    %v777 = vadd.f32 %v771, 1.0
    %v778 = vadd.f32 %v773, 1.0
    %v779 = vadd.f32 %v775, 1.0
    %v780 = vrcp.pop %v776
    %v781 = vmul.f32 1.0, %v780
    %v782 = vrcp.pop %v777
    %v783 = vmul.f32 1.0, %v782
    %v784 = vrcp.pop %v778
    %v785 = vmul.f32 1.0, %v784
    %v786 = vrcp.pop %v779
    %v787 = vmul.f32 1.0, %v786
    %792 = vrot.lane.b32.xlu0 %v781, 112
    %v793 = vpop.permute.xlu0 %792
    %794 = vrot.lane.b32.xlu0 %v783, 112
    %v795 = vpop.permute.xlu0 %794
    %796 = vrot.lane.b32.xlu0 %v785, 112
    %v797 = vpop.permute.xlu0 %796
    %798 = vrot.lane.b32.xlu0 %v787, 112
    %v799 = vpop.permute.xlu0 %798
    %v804 = vmul.f32 %v746, %v793
    %v805 = vmul.f32 %v751, %v795
    %v806 = vmul.f32 %v756, %v797
    %v807 = vmul.f32 %v761, %v799
    %v808 = vadd.f32 %v538, %v804
    %v809 = vadd.f32 %v539, %v805
    %v810 = vadd.f32 %v540, %v806
    %v811 = vadd.f32 %v541, %v807
    %812 = vst.msk [vmem:[#allocation2 + $0x2] sm:$0xff] %vm202, %v808
    %813 = vst.msk [vmem:[#allocation2 + $0xa] sm:$0xff] %vm202, %v809
    %814 = vst.msk [vmem:[#allocation2 + $0x1a] sm:$0xff] %vm202, %v810
    %815 = vst.msk [vmem:[#allocation2 + $0x22] sm:$0xff] %vm202, %v811
    %v816 = vld [vmem:[#allocation2] sm:$0xff]
    %v817 = vld [vmem:[#allocation2 + $0x8] sm:$0xff]
    %v818 = vld [vmem:[#allocation2 + $0x18] sm:$0xff]
    %v819 = vld [vmem:[#allocation2 + $0x20] sm:$0xff]
    %v820 = vld [vmem:[#allocation2 + $0x1] sm:$0xff]
    %v821 = vld [vmem:[#allocation2 + $0x9] sm:$0xff]
    %v822 = vld [vmem:[#allocation2 + $0x19] sm:$0xff]
    %v823 = vld [vmem:[#allocation2 + $0x21] sm:$0xff]
    %v824 = vld [vmem:[#allocation2 + $0x2] sm:$0xff]
    %v825 = vld [vmem:[#allocation2 + $0xa] sm:$0xff]
    %v826 = vld [vmem:[#allocation2 + $0x1a] sm:$0xff]
    %v827 = vld [vmem:[#allocation2 + $0x22] sm:$0xff]
    %v828 = vld [vmem:[#allocation2 + $0x3] sm:$0xff]
    %v829 = vld [vmem:[#allocation2 + $0xb] sm:$0xff]
    %v830 = vld [vmem:[#allocation2 + $0x1b] sm:$0xff]
    %v831 = vld [vmem:[#allocation2 + $0x23] sm:$0xff]
    %v832 = vld [vmem:[#allocation2 + $0x4] sm:$0xff]
    %v833 = vld [vmem:[#allocation2 + $0xc] sm:$0xff]
    %v834 = vld [vmem:[#allocation2 + $0x1c] sm:$0xff]
    %v835 = vld [vmem:[#allocation2 + $0x24] sm:$0xff]
    %840 = vrot.lane.b32.xlu0 %v820, 16
    %v841 = vpop.permute.xlu0 %840
    %842 = vrot.lane.b32.xlu0 %v821, 16
    %v843 = vpop.permute.xlu0 %842
    %844 = vrot.lane.b32.xlu0 %v822, 16
    %v845 = vpop.permute.xlu0 %844
    %846 = vrot.lane.b32.xlu0 %v823, 16
    %v847 = vpop.permute.xlu0 %846
    %856 = vrot.lane.b32.xlu0 %v824, 32
    %v857 = vpop.permute.xlu0 %856
    %858 = vrot.lane.b32.xlu0 %v825, 32
    %v859 = vpop.permute.xlu0 %858
    %860 = vrot.lane.b32.xlu0 %v826, 32
    %v861 = vpop.permute.xlu0 %860
    %862 = vrot.lane.b32.xlu0 %v827, 32
    %v863 = vpop.permute.xlu0 %862
    %872 = vrot.lane.b32.xlu0 %v828, 48
    %v873 = vpop.permute.xlu0 %872
    %874 = vrot.lane.b32.xlu0 %v829, 48
    %v875 = vpop.permute.xlu0 %874
    %876 = vrot.lane.b32.xlu0 %v830, 48
    %v877 = vpop.permute.xlu0 %876
    %878 = vrot.lane.b32.xlu0 %v831, 48
    %v879 = vpop.permute.xlu0 %878
    %888 = vrot.lane.b32.xlu0 %v832, 64
    %v889 = vpop.permute.xlu0 %888
    %890 = vrot.lane.b32.xlu0 %v833, 64
    %v891 = vpop.permute.xlu0 %890
    %892 = vrot.lane.b32.xlu0 %v834, 64
    %v893 = vpop.permute.xlu0 %892
    %894 = vrot.lane.b32.xlu0 %v835, 64
    %v895 = vpop.permute.xlu0 %894
    %v900 = vsel %vm202, %v816, %v841
    %v901 = vsel %vm202, %v817, %v843
    %v902 = vsel %vm202, %v818, %v845
    %v903 = vsel %vm202, %v819, %v847
    %v904 = vsel %vm634, %v900, %v857
    %v905 = vsel %vm634, %v901, %v859
    %v906 = vsel %vm634, %v902, %v861
    %v907 = vsel %vm634, %v903, %v863
    %v908 = vsel %vm639, %v904, %v873
    %v909 = vsel %vm639, %v905, %v875
    %v910 = vsel %vm639, %v906, %v877
    %v911 = vsel %vm639, %v907, %v879
    %v912 = vsel %vm644, %v908, %v889
    %v913 = vsel %vm644, %v909, %v891
    %v914 = vsel %vm644, %v910, %v893
    %v915 = vsel %vm644, %v911, %v895
    %v916 = vld [vmem:[%s10] sm:$0xff]
    %v917 = vld [vmem:[%s10 + $0x8] sm:$0xff]
    %v918 = vld [vmem:[%s10 + $0x10] sm:$0xff]
    %v919 = vld [vmem:[%s10 + $0x18] sm:$0xff]
    %v920 = vld [vmem:[%s10 + $0x20] sm:$0xff]
    %v921 = vld [vmem:[%s10 + $0x28] sm:$0xff]
    %v922 = vld [vmem:[%s10 + $0x30] sm:$0xff]
    %v923 = vld [vmem:[%s10 + $0x38] sm:$0xff]
    %v924 = vld [vmem:[%s10 + $0x40] sm:$0xff]
    %v925 = vld [vmem:[%s10 + $0x48] sm:$0xff]
    %v926 = vld [vmem:[#allocation14] sm:$0x1]
    %v928 = vlaneseq
    %v929 = vshrl.u32 %v928, 7
    %v930 = vsub.s32 0, %v929
    %v931 = vrot.slane %v926, %v930
    %v934 = vsel %vm666, %v912, 0
    %v937 = vsel %vm666, %v913, 0
    %v940 = vsel %vm666, %v914, 0
    %v943 = vsel %vm666, %v915, 0
    %945 = vmatprep.subr.mxu0 0.0
    %946 = vmatpush1.msra.mxu0 0.0
    %947 = vmatprep.subr.mxu0 0.0
    %948 = vmatpush1.msra.mxu0 0.0
    %949 = vmatprep.subr.mxu0 0.0
    %950 = vmatpush1.msra.mxu0 0.0
    %951 = vmatprep.subr.mxu0 0.0
    %952 = vmatpush1.msra.mxu0 0.0
    %953 = vmatprep.subr.mxu0 0.0
    %954 = vmatpush1.msra.mxu0 0.0
    %955 = vmatprep.subr.mxu0 0.0
    %956 = vmatpush1.msra.mxu0 0.0
    %957 = vmatprep.subr.mxu0 0.0
    %958 = vmatpush1.msra.mxu0 %v925
    %959 = vmatprep.subr.mxu0 0.0
    %960 = vmatpush1.msra.mxu0 %v924
    %961 = vmatprep.subr.mxu0 0.0
    %962 = vmatpush1.msra.mxu0 %v923
    %963 = vmatprep.subr.mxu0 0.0
    %964 = vmatpush1.msra.mxu0 %v922
    %965 = vmatprep.subr.mxu0 0.0
    %966 = vmatpush1.msra.mxu0 %v921
    %967 = vmatprep.subr.mxu0 0.0
    %968 = vmatpush1.msra.mxu0 %v920
    %969 = vmatprep.subr.mxu0 0.0
    %970 = vmatpush1.msra.mxu0 %v919
    %971 = vmatprep.subr.mxu0 0.0
    %972 = vmatpush1.msra.mxu0 %v918
    %973 = vmatprep.subr.mxu0 0.0
    %974 = vmatpush1.msra.mxu0 %v917
    %975 = vmatprep.subr.mxu0 0.0
    %976 = vmatpush1.msra.mxu0 %v916
    %977 = vmatprep.subr.mxu0 0.0
    %978 = vmatpush2.msra.mxu0 0.0
    %979 = vmatprep.subr.mxu0 0.0
    %980 = vmatpush2.msra.mxu0 0.0
    %981 = vmatprep.subr.mxu0 0.0
    %982 = vmatpush2.msra.mxu0 0.0
    %983 = vmatprep.subr.mxu0 0.0
    %984 = vmatpush2.msra.mxu0 0.0
    %985 = vmatprep.subr.mxu0 0.0
    %986 = vmatpush2.msra.mxu0 0.0
    %987 = vmatprep.subr.mxu0 0.0
    %988 = vmatpush2.msra.mxu0 0.0
    %989 = vmatprep.subr.mxu0 0.0
    %990 = vmatpush2.msra.mxu0 0.0
    %991 = vmatprep.subr.mxu0 0.0
    %992 = vmatpush2.msra.mxu0 0.0
    %993 = vmatprep.subr.mxu0 0.0
    %994 = vmatpush2.msra.mxu0 0.0
    %995 = vmatprep.subr.mxu0 0.0
    %996 = vmatpush2.msra.mxu0 0.0
    %997 = vmatprep.subr.mxu0 0.0
    %998 = vmatpush2.msra.mxu0 0.0
    %999 = vmatprep.subr.mxu0 0.0
    %1000 = vmatpush2.msra.mxu0 0.0
    %1001 = vmatprep.subr.mxu0 0.0
    %1002 = vmatpush2.msra.mxu0 0.0
    %1003 = vmatprep.subr.mxu0 0.0
    %1004 = vmatpush2.msra.mxu0 0.0
    %1005 = vmatprep.subr.mxu0 0.0
    %1006 = vmatpush2.msra.mxu0 0.0
    %1007 = vmatprep.subr.mxu0 0.0
    %1008 = vmatpush2.msra.mxu0 0.0
    %1009 = vmatprep.mubr.f32.mxu0 0.0
    %1010 = vmatmul.mubr.f32.gmra.mxu0 %v934
    %v1011 = vpop.f32.mrf.mxu0
    %v1012 = vadd.f32 %v931, %v1011
    %v1013 = vpop.f32.mrf.mxu0
    %1014 = vmatprep.mubr.f32.mxu0 0.0
    %1015 = vmatmul.mubr.f32.gmra.mxu0 %v937
    %v1016 = vpop.f32.mrf.mxu0
    %v1017 = vadd.f32 %v931, %v1016
    %v1018 = vpop.f32.mrf.mxu0
    %1019 = vmatprep.mubr.f32.mxu0 0.0
    %1020 = vmatmul.mubr.f32.gmra.mxu0 %v940
    %v1021 = vpop.f32.mrf.mxu0
    %v1022 = vadd.f32 %v931, %v1021
    %v1023 = vpop.f32.mrf.mxu0
    %1024 = vmatprep.mubr.f32.mxu0 0.0
    %1025 = vmatmul.mubr.f32.gmra.mxu0 %v943
    %v1026 = vpop.f32.mrf.mxu0
    %v1027 = vadd.f32 %v931, %v1026
    %v1028 = vpop.f32.mrf.mxu0
    %1029 = vdwg.mxu0
    %v1030 = vsub.f32 0.0, %v1012
    %v1031 = vsub.f32 0.0, %v1017
    %v1032 = vsub.f32 0.0, %v1022
    %v1033 = vsub.f32 0.0, %v1027
    %v1034 = vmul.f32 %v1030, 1.442695
    %v1035 = vpow.pop %v1034
    %v1036 = vmul.f32 %v1031, 1.442695
    %v1037 = vpow.pop %v1036
    %v1038 = vmul.f32 %v1032, 1.442695
    %v1039 = vpow.pop %v1038
    %v1040 = vmul.f32 %v1033, 1.442695
    %v1041 = vpow.pop %v1040
    %v1042 = vadd.f32 %v1035, 1.0
    %v1043 = vadd.f32 %v1037, 1.0
    %v1044 = vadd.f32 %v1039, 1.0
    %v1045 = vadd.f32 %v1041, 1.0
    %v1046 = vrcp.pop %v1042
    %v1047 = vmul.f32 1.0, %v1046
    %v1048 = vrcp.pop %v1043
    %v1049 = vmul.f32 1.0, %v1048
    %v1050 = vrcp.pop %v1044
    %v1051 = vmul.f32 1.0, %v1050
    %v1052 = vrcp.pop %v1045
    %v1053 = vmul.f32 1.0, %v1052
    %1058 = vrot.lane.b32.xlu0 %v1047, 112
    %v1059 = vpop.permute.xlu0 %1058
    %1060 = vrot.lane.b32.xlu0 %v1049, 112
    %v1061 = vpop.permute.xlu0 %1060
    %1062 = vrot.lane.b32.xlu0 %v1051, 112
    %v1063 = vpop.permute.xlu0 %1062
    %1064 = vrot.lane.b32.xlu0 %v1053, 112
    %v1065 = vpop.permute.xlu0 %1064
    %v1070 = vmul.f32 %v1012, %v1059
    %v1071 = vmul.f32 %v1017, %v1061
    %v1072 = vmul.f32 %v1022, %v1063
    %v1073 = vmul.f32 %v1027, %v1065
    %v1074 = vadd.f32 %v808, %v1070
    %v1075 = vadd.f32 %v809, %v1071
    %v1076 = vadd.f32 %v810, %v1072
    %v1077 = vadd.f32 %v811, %v1073
    %v1078 = vld [vmem:[%s2] sm:$0xff]
    %v1079 = vld [vmem:[%s2 + $0x8] sm:$0xff]
    %v1080 = vld [vmem:[%s2 + $0x10] sm:$0xff]
    %v1081 = vld [vmem:[%s2 + $0x18] sm:$0xff]
    %1083 = vset.pattern.permute.xlu0 0
    %1084 = vperm.xlu0 %1083, %v1078
    %v1085 = vpop.permute.xlu0 %1084
    %1088 = vset.pattern.permute.xlu0 0
    %1089 = vperm.xlu0 %1088, %v1079
    %v1090 = vpop.permute.xlu0 %1089
    %1093 = vset.pattern.permute.xlu0 0
    %1094 = vperm.xlu0 %1093, %v1080
    %v1095 = vpop.permute.xlu0 %1094
    %1098 = vset.pattern.permute.xlu0 0
    %1099 = vperm.xlu0 %1098, %v1081
    %v1100 = vpop.permute.xlu0 %1099
    %v1102 = vmul.f32 %v1074, %v1085
    %v1103 = vmul.f32 %v1075, %v1090
    %v1104 = vmul.f32 %v1076, %v1095
    %v1105 = vmul.f32 %v1077, %v1100
    %v1106 = vld [vmem:[%s12] sm:$0xff]
    %v1107 = vld [vmem:[%s12 + $0x8] sm:$0xff]
    %v1108 = vld [vmem:[%s13] sm:$0x1]
    %v1110 = vlaneseq
    %v1111 = vshrl.u32 %v1110, 7
    %v1112 = vsub.s32 0, %v1111
    %v1113 = vrot.slane %v1108, %v1112
    %v1116 = vsel %vm202, %v1102, 0
    %v1119 = vsel %vm202, %v1103, 0
    %v1122 = vsel %vm202, %v1104, 0
    %v1125 = vsel %vm202, %v1105, 0
    %1127 = vmatprep.subr.mxu0 0.0
    %1128 = vmatpush1.msra.mxu0 0.0
    %1129 = vmatprep.subr.mxu0 0.0
    %1130 = vmatpush1.msra.mxu0 0.0
    %1131 = vmatprep.subr.mxu0 0.0
    %1132 = vmatpush1.msra.mxu0 0.0
    %1133 = vmatprep.subr.mxu0 0.0
    %1134 = vmatpush1.msra.mxu0 0.0
    %1135 = vmatprep.subr.mxu0 0.0
    %1136 = vmatpush1.msra.mxu0 0.0
    %1137 = vmatprep.subr.mxu0 0.0
    %1138 = vmatpush1.msra.mxu0 0.0
    %1139 = vmatprep.subr.mxu0 0.0
    %1140 = vmatpush1.msra.mxu0 0.0
    %1141 = vmatprep.subr.mxu0 0.0
    %1142 = vmatpush1.msra.mxu0 0.0
    %1143 = vmatprep.subr.mxu0 0.0
    %1144 = vmatpush1.msra.mxu0 0.0
    %1145 = vmatprep.subr.mxu0 0.0
    %1146 = vmatpush1.msra.mxu0 0.0
    %1147 = vmatprep.subr.mxu0 0.0
    %1148 = vmatpush1.msra.mxu0 0.0
    %1149 = vmatprep.subr.mxu0 0.0
    %1150 = vmatpush1.msra.mxu0 0.0
    %1151 = vmatprep.subr.mxu0 0.0
    %1152 = vmatpush1.msra.mxu0 0.0
    %1153 = vmatprep.subr.mxu0 0.0
    %1154 = vmatpush1.msra.mxu0 0.0
    %1155 = vmatprep.subr.mxu0 0.0
    %1156 = vmatpush1.msra.mxu0 %v1107
    %1157 = vmatprep.subr.mxu0 0.0
    %1158 = vmatpush1.msra.mxu0 %v1106
    %1159 = vmatprep.subr.mxu0 0.0
    %1160 = vmatpush2.msra.mxu0 0.0
    %1161 = vmatprep.subr.mxu0 0.0
    %1162 = vmatpush2.msra.mxu0 0.0
    %1163 = vmatprep.subr.mxu0 0.0
    %1164 = vmatpush2.msra.mxu0 0.0
    %1165 = vmatprep.subr.mxu0 0.0
    %1166 = vmatpush2.msra.mxu0 0.0
    %1167 = vmatprep.subr.mxu0 0.0
    %1168 = vmatpush2.msra.mxu0 0.0
    %1169 = vmatprep.subr.mxu0 0.0
    %1170 = vmatpush2.msra.mxu0 0.0
    %1171 = vmatprep.subr.mxu0 0.0
    %1172 = vmatpush2.msra.mxu0 0.0
    %1173 = vmatprep.subr.mxu0 0.0
    %1174 = vmatpush2.msra.mxu0 0.0
    %1175 = vmatprep.subr.mxu0 0.0
    %1176 = vmatpush2.msra.mxu0 0.0
    %1177 = vmatprep.subr.mxu0 0.0
    %1178 = vmatpush2.msra.mxu0 0.0
    %1179 = vmatprep.subr.mxu0 0.0
    %1180 = vmatpush2.msra.mxu0 0.0
    %1181 = vmatprep.subr.mxu0 0.0
    %1182 = vmatpush2.msra.mxu0 0.0
    %1183 = vmatprep.subr.mxu0 0.0
    %1184 = vmatpush2.msra.mxu0 0.0
    %1185 = vmatprep.subr.mxu0 0.0
    %1186 = vmatpush2.msra.mxu0 0.0
    %1187 = vmatprep.subr.mxu0 0.0
    %1188 = vmatpush2.msra.mxu0 0.0
    %1189 = vmatprep.subr.mxu0 0.0
    %1190 = vmatpush2.msra.mxu0 0.0
    %1191 = vmatprep.mubr.f32.mxu0 0.0
    %1192 = vmatmul.mubr.f32.gmra.mxu0 %v1116
    %v1193 = vpop.f32.mrf.mxu0
    %v1194 = vadd.f32 %v1113, %v1193
    %v1195 = vpop.f32.mrf.mxu0
    %1196 = vmatprep.mubr.f32.mxu0 0.0
    %1197 = vmatmul.mubr.f32.gmra.mxu0 %v1119
    %v1198 = vpop.f32.mrf.mxu0
    %v1199 = vadd.f32 %v1113, %v1198
    %v1200 = vpop.f32.mrf.mxu0
    %1201 = vmatprep.mubr.f32.mxu0 0.0
    %1202 = vmatmul.mubr.f32.gmra.mxu0 %v1122
    %v1203 = vpop.f32.mrf.mxu0
    %v1204 = vadd.f32 %v1113, %v1203
    %v1205 = vpop.f32.mrf.mxu0
    %1206 = vmatprep.mubr.f32.mxu0 0.0
    %1207 = vmatmul.mubr.f32.gmra.mxu0 %v1125
    %v1208 = vpop.f32.mrf.mxu0
    %v1209 = vadd.f32 %v1113, %v1208
    %v1210 = vpop.f32.mrf.mxu0
    %1211 = vdwg.mxu0
    %v1212 = vld [vmem:[%s1] sm:$0x1]
    %v1213 = vmul.f32 %v1212, -1e+09
    %1216 = vrot.lane.b32.xlu0 %v1194, 112
    %v1217 = vpop.permute.xlu0 %1216
    %1218 = vrot.lane.b32.xlu0 %v1199, 112
    %v1219 = vpop.permute.xlu0 %1218
    %vm1220 = vcmask 64512
    %v1221 = vsel %vm1220, %v1194, 0
    %v1223 = vsel %vm1220, %v1199, 0
    %v1225 = vsel %vm1220, %v1217, 0
    %v1227 = vsel %vm1220, %v1219, 0
    %1229 = vmatprep.subr.mxu0 0.0
    %1230 = vmatpush1.xpose.msra.mxu0 0.0
    %1231 = vmatprep.subr.mxu0 0.0
    %1232 = vmatpush1.xpose.msra.mxu0 0.0
    %1233 = vmatprep.subr.mxu0 0.0
    %1234 = vmatpush1.xpose.msra.mxu0 0.0
    %1235 = vmatprep.subr.mxu0 0.0
    %1236 = vmatpush1.xpose.msra.mxu0 0.0
    %1237 = vmatprep.subr.mxu0 0.0
    %1238 = vmatpush1.xpose.msra.mxu0 0.0
    %1239 = vmatprep.subr.mxu0 0.0
    %1240 = vmatpush1.xpose.msra.mxu0 0.0
    %1241 = vmatprep.subr.mxu0 0.0
    %1242 = vmatpush1.xpose.msra.mxu0 0.0
    %1243 = vmatprep.subr.mxu0 0.0
    %1244 = vmatpush1.xpose.msra.mxu0 0.0
    %1245 = vmatprep.subr.mxu0 0.0
    %1246 = vmatpush1.xpose.msra.mxu0 0.0
    %1247 = vmatprep.subr.mxu0 0.0
    %1248 = vmatpush1.xpose.msra.mxu0 0.0
    %1249 = vmatprep.subr.mxu0 0.0
    %1250 = vmatpush1.xpose.msra.mxu0 0.0
    %1251 = vmatprep.subr.mxu0 0.0
    %1252 = vmatpush1.xpose.msra.mxu0 0.0
    %1253 = vmatprep.subr.mxu0 0.0
    %1254 = vmatpush1.xpose.msra.mxu0 0.0
    %1255 = vmatprep.subr.mxu0 0.0
    %1256 = vmatpush1.xpose.msra.mxu0 0.0
    %1257 = vmatprep.subr.mxu0 0.0
    %1258 = vmatpush1.xpose.msra.mxu0 %v1227
    %1259 = vmatprep.subr.mxu0 0.0
    %1260 = vmatpush1.xpose.msra.mxu0 %v1225
    %1261 = vmatprep.subr.mxu0 0.0
    %1262 = vmatpush2.xpose.msra.mxu0 0.0
    %1263 = vmatprep.subr.mxu0 0.0
    %1264 = vmatpush2.xpose.msra.mxu0 0.0
    %1265 = vmatprep.subr.mxu0 0.0
    %1266 = vmatpush2.xpose.msra.mxu0 0.0
    %1267 = vmatprep.subr.mxu0 0.0
    %1268 = vmatpush2.xpose.msra.mxu0 0.0
    %1269 = vmatprep.subr.mxu0 0.0
    %1270 = vmatpush2.xpose.msra.mxu0 0.0
    %1271 = vmatprep.subr.mxu0 0.0
    %1272 = vmatpush2.xpose.msra.mxu0 0.0
    %1273 = vmatprep.subr.mxu0 0.0
    %1274 = vmatpush2.xpose.msra.mxu0 0.0
    %1275 = vmatprep.subr.mxu0 0.0
    %1276 = vmatpush2.xpose.msra.mxu0 0.0
    %1277 = vmatprep.subr.mxu0 0.0
    %1278 = vmatpush2.xpose.msra.mxu0 0.0
    %1279 = vmatprep.subr.mxu0 0.0
    %1280 = vmatpush2.xpose.msra.mxu0 0.0
    %1281 = vmatprep.subr.mxu0 0.0
    %1282 = vmatpush2.xpose.msra.mxu0 0.0
    %1283 = vmatprep.subr.mxu0 0.0
    %1284 = vmatpush2.xpose.msra.mxu0 0.0
    %1285 = vmatprep.subr.mxu0 0.0
    %1286 = vmatpush2.xpose.msra.mxu0 0.0
    %1287 = vmatprep.subr.mxu0 0.0
    %1288 = vmatpush2.xpose.msra.mxu0 0.0
    %1289 = vmatprep.subr.mxu0 0.0
    %1290 = vmatpush2.xpose.msra.mxu0 0.0
    %1291 = vmatprep.subr.mxu0 0.0
    %1292 = vmatpush2.xpose.msra.mxu0 0.0
    %1293 = vmatprep.mubr.f32.mxu0 0.0
    %1294 = vmatmul.mubr.f32.gmra.mxu0 %v1221
    %v1295 = vpop.f32.mrf.mxu0
    %v1296 = vadd.f32 0.0, %v1295
    %v1297 = vpop.f32.mrf.mxu0
    %1298 = vmatprep.mubr.f32.mxu0 0.0
    %1299 = vmatmul.mubr.f32.gmra.mxu0 %v1223
    %v1300 = vpop.f32.mrf.mxu0
    %v1301 = vadd.f32 0.0, %v1300
    %v1302 = vpop.f32.mrf.mxu0
    %1303 = vdwg.mxu0
    %v1304 = vmul.f32 %v1296, 0.25
    %v1305 = vmul.f32 %v1301, 0.25
    %v1306 = vlaneseq
    %v1307 = vshrl.u32 %v1306, 7
    %v1308 = vsub.s32 0, %v1307
    %v1309 = vrot.slane %v1213, %v1308
    %v1310 = vadd.f32 %v1304, %v1309
    %v1311 = vadd.f32 %v1305, %v1309
    %v1312 = vsel %vm202, %v1310, -inf
    %1313 = vmax.xlane.f32.xlu0 %v1312
    %v1314 = vpop.xlane.xlu0 %1313
    %v1315 = vsel %vm202, %v1311, -inf
    %1316 = vmax.xlane.f32.xlu0 %v1315
    %v1317 = vpop.xlane.xlu0 %1316
    %v1318 = vsub.f32 %v1310, %v1314
    %v1319 = vsub.f32 %v1311, %v1317
    %v1320 = vmul.f32 %v1318, 1.442695
    %v1321 = vpow.pop %v1320
    %v1322 = vmul.f32 %v1319, 1.442695
    %v1323 = vpow.pop %v1322
    %v1324 = vsel %vm202, %v1321, 0.0
    %1325 = vadd.xlane.f32.xlu0 %v1324
    %v1326 = vpop.xlane.xlu0 %1325
    %v1327 = vsel %vm202, %v1323, 0.0
    %1328 = vadd.xlane.f32.xlu0 %v1327
    %v1329 = vpop.xlane.xlu0 %1328
    %v1330 = vrcp.pop %v1326
    %v1331 = vrcp.pop %v1329
    %v1332 = vmul.f32 %v1321, %v1330
    %v1333 = vmul.f32 %v1323, %v1331
    %1334 = vrot.lane.b32.xlu0 %v1194, 96
    %v1335 = vpop.permute.xlu0 %1334
    %1336 = vrot.lane.b32.xlu0 %v1199, 96
    %v1337 = vpop.permute.xlu0 %1336
    %v1341 = vsel %vm202, %v1332, 0
    %v1344 = vsel %vm202, %v1333, 0
    %1346 = vmatprep.subr.mxu0 0.0
    %1347 = vmatpush1.msra.mxu0 0.0
    %1348 = vmatprep.subr.mxu0 0.0
    %1349 = vmatpush1.msra.mxu0 0.0
    %1350 = vmatprep.subr.mxu0 0.0
    %1351 = vmatpush1.msra.mxu0 0.0
    %1352 = vmatprep.subr.mxu0 0.0
    %1353 = vmatpush1.msra.mxu0 0.0
    %1354 = vmatprep.subr.mxu0 0.0
    %1355 = vmatpush1.msra.mxu0 0.0
    %1356 = vmatprep.subr.mxu0 0.0
    %1357 = vmatpush1.msra.mxu0 0.0
    %1358 = vmatprep.subr.mxu0 0.0
    %1359 = vmatpush1.msra.mxu0 0.0
    %1360 = vmatprep.subr.mxu0 0.0
    %1361 = vmatpush1.msra.mxu0 0.0
    %1362 = vmatprep.subr.mxu0 0.0
    %1363 = vmatpush1.msra.mxu0 0.0
    %1364 = vmatprep.subr.mxu0 0.0
    %1365 = vmatpush1.msra.mxu0 0.0
    %1366 = vmatprep.subr.mxu0 0.0
    %1367 = vmatpush1.msra.mxu0 0.0
    %1368 = vmatprep.subr.mxu0 0.0
    %1369 = vmatpush1.msra.mxu0 0.0
    %1370 = vmatprep.subr.mxu0 0.0
    %1371 = vmatpush1.msra.mxu0 0.0
    %1372 = vmatprep.subr.mxu0 0.0
    %1373 = vmatpush1.msra.mxu0 0.0
    %1374 = vmatprep.subr.mxu0 0.0
    %1375 = vmatpush1.msra.mxu0 %v1337
    %1376 = vmatprep.subr.mxu0 0.0
    %1377 = vmatpush1.msra.mxu0 %v1335
    %1378 = vmatprep.subr.mxu0 0.0
    %1379 = vmatpush2.msra.mxu0 0.0
    %1380 = vmatprep.subr.mxu0 0.0
    %1381 = vmatpush2.msra.mxu0 0.0
    %1382 = vmatprep.subr.mxu0 0.0
    %1383 = vmatpush2.msra.mxu0 0.0
    %1384 = vmatprep.subr.mxu0 0.0
    %1385 = vmatpush2.msra.mxu0 0.0
    %1386 = vmatprep.subr.mxu0 0.0
    %1387 = vmatpush2.msra.mxu0 0.0
    %1388 = vmatprep.subr.mxu0 0.0
    %1389 = vmatpush2.msra.mxu0 0.0
    %1390 = vmatprep.subr.mxu0 0.0
    %1391 = vmatpush2.msra.mxu0 0.0
    %1392 = vmatprep.subr.mxu0 0.0
    %1393 = vmatpush2.msra.mxu0 0.0
    %1394 = vmatprep.subr.mxu0 0.0
    %1395 = vmatpush2.msra.mxu0 0.0
    %1396 = vmatprep.subr.mxu0 0.0
    %1397 = vmatpush2.msra.mxu0 0.0
    %1398 = vmatprep.subr.mxu0 0.0
    %1399 = vmatpush2.msra.mxu0 0.0
    %1400 = vmatprep.subr.mxu0 0.0
    %1401 = vmatpush2.msra.mxu0 0.0
    %1402 = vmatprep.subr.mxu0 0.0
    %1403 = vmatpush2.msra.mxu0 0.0
    %1404 = vmatprep.subr.mxu0 0.0
    %1405 = vmatpush2.msra.mxu0 0.0
    %1406 = vmatprep.subr.mxu0 0.0
    %1407 = vmatpush2.msra.mxu0 0.0
    %1408 = vmatprep.subr.mxu0 0.0
    %1409 = vmatpush2.msra.mxu0 0.0
    %1410 = vmatprep.mubr.f32.mxu0 0.0
    %1411 = vmatmul.mubr.f32.gmra.mxu0 %v1341
    %v1412 = vpop.f32.mrf.mxu0
    %v1413 = vadd.f32 0.0, %v1412
    %v1414 = vpop.f32.mrf.mxu0
    %1415 = vmatprep.mubr.f32.mxu0 0.0
    %1416 = vmatmul.mubr.f32.gmra.mxu0 %v1344
    %v1417 = vpop.f32.mrf.mxu0
    %v1418 = vadd.f32 0.0, %v1417
    %v1419 = vpop.f32.mrf.mxu0
    %1420 = vdwg.mxu0
    %1421 = vrot.lane.b32.xlu0 %v1194, 120
    %v1422 = vpop.permute.xlu0 %1421
    %1423 = vrot.lane.b32.xlu0 %v1199, 120
    %v1424 = vpop.permute.xlu0 %1423
    %1425 = vrot.lane.b32.xlu0 %v1194, 104
    %v1426 = vpop.permute.xlu0 %1425
    %1427 = vrot.lane.b32.xlu0 %v1199, 104
    %v1428 = vpop.permute.xlu0 %1427
    %v1429 = vsel %vm1220, %v1422, 0
    %v1431 = vsel %vm1220, %v1424, 0
    %v1433 = vsel %vm1220, %v1426, 0
    %v1435 = vsel %vm1220, %v1428, 0
    %1437 = vmatprep.subr.mxu0 0.0
    %1438 = vmatpush1.xpose.msra.mxu0 0.0
    %1439 = vmatprep.subr.mxu0 0.0
    %1440 = vmatpush1.xpose.msra.mxu0 0.0
    %1441 = vmatprep.subr.mxu0 0.0
    %1442 = vmatpush1.xpose.msra.mxu0 0.0
    %1443 = vmatprep.subr.mxu0 0.0
    %1444 = vmatpush1.xpose.msra.mxu0 0.0
    %1445 = vmatprep.subr.mxu0 0.0
    %1446 = vmatpush1.xpose.msra.mxu0 0.0
    %1447 = vmatprep.subr.mxu0 0.0
    %1448 = vmatpush1.xpose.msra.mxu0 0.0
    %1449 = vmatprep.subr.mxu0 0.0
    %1450 = vmatpush1.xpose.msra.mxu0 0.0
    %1451 = vmatprep.subr.mxu0 0.0
    %1452 = vmatpush1.xpose.msra.mxu0 0.0
    %1453 = vmatprep.subr.mxu0 0.0
    %1454 = vmatpush1.xpose.msra.mxu0 0.0
    %1455 = vmatprep.subr.mxu0 0.0
    %1456 = vmatpush1.xpose.msra.mxu0 0.0
    %1457 = vmatprep.subr.mxu0 0.0
    %1458 = vmatpush1.xpose.msra.mxu0 0.0
    %1459 = vmatprep.subr.mxu0 0.0
    %1460 = vmatpush1.xpose.msra.mxu0 0.0
    %1461 = vmatprep.subr.mxu0 0.0
    %1462 = vmatpush1.xpose.msra.mxu0 0.0
    %1463 = vmatprep.subr.mxu0 0.0
    %1464 = vmatpush1.xpose.msra.mxu0 0.0
    %1465 = vmatprep.subr.mxu0 0.0
    %1466 = vmatpush1.xpose.msra.mxu0 %v1435
    %1467 = vmatprep.subr.mxu0 0.0
    %1468 = vmatpush1.xpose.msra.mxu0 %v1433
    %1469 = vmatprep.subr.mxu0 0.0
    %1470 = vmatpush2.xpose.msra.mxu0 0.0
    %1471 = vmatprep.subr.mxu0 0.0
    %1472 = vmatpush2.xpose.msra.mxu0 0.0
    %1473 = vmatprep.subr.mxu0 0.0
    %1474 = vmatpush2.xpose.msra.mxu0 0.0
    %1475 = vmatprep.subr.mxu0 0.0
    %1476 = vmatpush2.xpose.msra.mxu0 0.0
    %1477 = vmatprep.subr.mxu0 0.0
    %1478 = vmatpush2.xpose.msra.mxu0 0.0
    %1479 = vmatprep.subr.mxu0 0.0
    %1480 = vmatpush2.xpose.msra.mxu0 0.0
    %1481 = vmatprep.subr.mxu0 0.0
    %1482 = vmatpush2.xpose.msra.mxu0 0.0
    %1483 = vmatprep.subr.mxu0 0.0
    %1484 = vmatpush2.xpose.msra.mxu0 0.0
    %1485 = vmatprep.subr.mxu0 0.0
    %1486 = vmatpush2.xpose.msra.mxu0 0.0
    %1487 = vmatprep.subr.mxu0 0.0
    %1488 = vmatpush2.xpose.msra.mxu0 0.0
    %1489 = vmatprep.subr.mxu0 0.0
    %1490 = vmatpush2.xpose.msra.mxu0 0.0
    %1491 = vmatprep.subr.mxu0 0.0
    %1492 = vmatpush2.xpose.msra.mxu0 0.0
    %1493 = vmatprep.subr.mxu0 0.0
    %1494 = vmatpush2.xpose.msra.mxu0 0.0
    %1495 = vmatprep.subr.mxu0 0.0
    %1496 = vmatpush2.xpose.msra.mxu0 0.0
    %1497 = vmatprep.subr.mxu0 0.0
    %1498 = vmatpush2.xpose.msra.mxu0 0.0
    %1499 = vmatprep.subr.mxu0 0.0
    %1500 = vmatpush2.xpose.msra.mxu0 0.0
    %1501 = vmatprep.mubr.f32.mxu0 0.0
    %1502 = vmatmul.mubr.f32.gmra.mxu0 %v1429
    %v1503 = vpop.f32.mrf.mxu0
    %v1504 = vadd.f32 0.0, %v1503
    %v1505 = vpop.f32.mrf.mxu0
    %1506 = vmatprep.mubr.f32.mxu0 0.0
    %1507 = vmatmul.mubr.f32.gmra.mxu0 %v1431
    %v1508 = vpop.f32.mrf.mxu0
    %v1509 = vadd.f32 0.0, %v1508
    %v1510 = vpop.f32.mrf.mxu0
    %1511 = vdwg.mxu0
    %v1512 = vmul.f32 %v1504, 0.25
    %v1513 = vmul.f32 %v1509, 0.25
    %v1514 = vadd.f32 %v1512, %v1309
    %v1515 = vadd.f32 %v1513, %v1309
    %v1516 = vsel %vm202, %v1514, -inf
    %1517 = vmax.xlane.f32.xlu0 %v1516
    %v1518 = vpop.xlane.xlu0 %1517
    %v1519 = vsel %vm202, %v1515, -inf
    %1520 = vmax.xlane.f32.xlu0 %v1519
    %v1521 = vpop.xlane.xlu0 %1520
    %v1522 = vsub.f32 %v1514, %v1518
    %v1523 = vsub.f32 %v1515, %v1521
    %v1524 = vmul.f32 %v1522, 1.442695
    %v1525 = vpow.pop %v1524
    %v1526 = vmul.f32 %v1523, 1.442695
    %v1527 = vpow.pop %v1526
    %v1528 = vsel %vm202, %v1525, 0.0
    %1529 = vadd.xlane.f32.xlu0 %v1528
    %v1530 = vpop.xlane.xlu0 %1529
    %v1531 = vsel %vm202, %v1527, 0.0
    %1532 = vadd.xlane.f32.xlu0 %v1531
    %v1533 = vpop.xlane.xlu0 %1532
    %v1534 = vrcp.pop %v1530
    %v1535 = vrcp.pop %v1533
    %v1536 = vmul.f32 %v1525, %v1534
    %v1537 = vmul.f32 %v1527, %v1535
    %1538 = vrot.lane.b32.xlu0 %v1194, 88
    %v1539 = vpop.permute.xlu0 %1538
    %1540 = vrot.lane.b32.xlu0 %v1199, 88
    %v1541 = vpop.permute.xlu0 %1540
    %v1545 = vsel %vm202, %v1536, 0
    %v1548 = vsel %vm202, %v1537, 0
    %1550 = vmatprep.subr.mxu0 0.0
    %1551 = vmatpush1.msra.mxu0 0.0
    %1552 = vmatprep.subr.mxu0 0.0
    %1553 = vmatpush1.msra.mxu0 0.0
    %1554 = vmatprep.subr.mxu0 0.0
    %1555 = vmatpush1.msra.mxu0 0.0
    %1556 = vmatprep.subr.mxu0 0.0
    %1557 = vmatpush1.msra.mxu0 0.0
    %1558 = vmatprep.subr.mxu0 0.0
    %1559 = vmatpush1.msra.mxu0 0.0
    %1560 = vmatprep.subr.mxu0 0.0
    %1561 = vmatpush1.msra.mxu0 0.0
    %1562 = vmatprep.subr.mxu0 0.0
    %1563 = vmatpush1.msra.mxu0 0.0
    %1564 = vmatprep.subr.mxu0 0.0
    %1565 = vmatpush1.msra.mxu0 0.0
    %1566 = vmatprep.subr.mxu0 0.0
    %1567 = vmatpush1.msra.mxu0 0.0
    %1568 = vmatprep.subr.mxu0 0.0
    %1569 = vmatpush1.msra.mxu0 0.0
    %1570 = vmatprep.subr.mxu0 0.0
    %1571 = vmatpush1.msra.mxu0 0.0
    %1572 = vmatprep.subr.mxu0 0.0
    %1573 = vmatpush1.msra.mxu0 0.0
    %1574 = vmatprep.subr.mxu0 0.0
    %1575 = vmatpush1.msra.mxu0 0.0
    %1576 = vmatprep.subr.mxu0 0.0
    %1577 = vmatpush1.msra.mxu0 0.0
    %1578 = vmatprep.subr.mxu0 0.0
    %1579 = vmatpush1.msra.mxu0 %v1541
    %1580 = vmatprep.subr.mxu0 0.0
    %1581 = vmatpush1.msra.mxu0 %v1539
    %1582 = vmatprep.subr.mxu0 0.0
    %1583 = vmatpush2.msra.mxu0 0.0
    %1584 = vmatprep.subr.mxu0 0.0
    %1585 = vmatpush2.msra.mxu0 0.0
    %1586 = vmatprep.subr.mxu0 0.0
    %1587 = vmatpush2.msra.mxu0 0.0
    %1588 = vmatprep.subr.mxu0 0.0
    %1589 = vmatpush2.msra.mxu0 0.0
    %1590 = vmatprep.subr.mxu0 0.0
    %1591 = vmatpush2.msra.mxu0 0.0
    %1592 = vmatprep.subr.mxu0 0.0
    %1593 = vmatpush2.msra.mxu0 0.0
    %1594 = vmatprep.subr.mxu0 0.0
    %1595 = vmatpush2.msra.mxu0 0.0
    %1596 = vmatprep.subr.mxu0 0.0
    %1597 = vmatpush2.msra.mxu0 0.0
    %1598 = vmatprep.subr.mxu0 0.0
    %1599 = vmatpush2.msra.mxu0 0.0
    %1600 = vmatprep.subr.mxu0 0.0
    %1601 = vmatpush2.msra.mxu0 0.0
    %1602 = vmatprep.subr.mxu0 0.0
    %1603 = vmatpush2.msra.mxu0 0.0
    %1604 = vmatprep.subr.mxu0 0.0
    %1605 = vmatpush2.msra.mxu0 0.0
    %1606 = vmatprep.subr.mxu0 0.0
    %1607 = vmatpush2.msra.mxu0 0.0
    %1608 = vmatprep.subr.mxu0 0.0
    %1609 = vmatpush2.msra.mxu0 0.0
    %1610 = vmatprep.subr.mxu0 0.0
    %1611 = vmatpush2.msra.mxu0 0.0
    %1612 = vmatprep.subr.mxu0 0.0
    %1613 = vmatpush2.msra.mxu0 0.0
    %1614 = vmatprep.mubr.f32.mxu0 0.0
    %1615 = vmatmul.mubr.f32.gmra.mxu0 %v1545
    %v1616 = vpop.f32.mrf.mxu0
    %v1617 = vadd.f32 0.0, %v1616
    %v1618 = vpop.f32.mrf.mxu0
    %1619 = vmatprep.mubr.f32.mxu0 0.0
    %1620 = vmatmul.mubr.f32.gmra.mxu0 %v1548
    %v1621 = vpop.f32.mrf.mxu0
    %v1622 = vadd.f32 0.0, %v1621
    %v1623 = vpop.f32.mrf.mxu0
    %1624 = vdwg.mxu0
    %1627 = vrot.lane.b32.xlu0 %v1617, 8
    %v1628 = vpop.permute.xlu0 %1627
    %1629 = vrot.lane.b32.xlu0 %v1622, 8
    %v1630 = vpop.permute.xlu0 %1629
    %v1633 = vsel %vm1220, %v1413, %v1628
    %v1634 = vsel %vm1220, %v1418, %v1630
    %v1635 = vld [vmem:[%s1 + $0x1] sm:$0x1]
    %v1636 = vmul.f32 %v1635, -1e+09
    %1639 = vrot.lane.b32.xlu0 %v1204, 112
    %v1640 = vpop.permute.xlu0 %1639
    %1641 = vrot.lane.b32.xlu0 %v1209, 112
    %v1642 = vpop.permute.xlu0 %1641
    %v1643 = vsel %vm1220, %v1204, 0
    %v1645 = vsel %vm1220, %v1209, 0
    %v1647 = vsel %vm1220, %v1640, 0
    %v1649 = vsel %vm1220, %v1642, 0
    %1651 = vmatprep.subr.mxu0 0.0
    %1652 = vmatpush1.xpose.msra.mxu0 0.0
    %1653 = vmatprep.subr.mxu0 0.0
    %1654 = vmatpush1.xpose.msra.mxu0 0.0
    %1655 = vmatprep.subr.mxu0 0.0
    %1656 = vmatpush1.xpose.msra.mxu0 0.0
    %1657 = vmatprep.subr.mxu0 0.0
    %1658 = vmatpush1.xpose.msra.mxu0 0.0
    %1659 = vmatprep.subr.mxu0 0.0
    %1660 = vmatpush1.xpose.msra.mxu0 0.0
    %1661 = vmatprep.subr.mxu0 0.0
    %1662 = vmatpush1.xpose.msra.mxu0 0.0
    %1663 = vmatprep.subr.mxu0 0.0
    %1664 = vmatpush1.xpose.msra.mxu0 0.0
    %1665 = vmatprep.subr.mxu0 0.0
    %1666 = vmatpush1.xpose.msra.mxu0 0.0
    %1667 = vmatprep.subr.mxu0 0.0
    %1668 = vmatpush1.xpose.msra.mxu0 0.0
    %1669 = vmatprep.subr.mxu0 0.0
    %1670 = vmatpush1.xpose.msra.mxu0 0.0
    %1671 = vmatprep.subr.mxu0 0.0
    %1672 = vmatpush1.xpose.msra.mxu0 0.0
    %1673 = vmatprep.subr.mxu0 0.0
    %1674 = vmatpush1.xpose.msra.mxu0 0.0
    %1675 = vmatprep.subr.mxu0 0.0
    %1676 = vmatpush1.xpose.msra.mxu0 0.0
    %1677 = vmatprep.subr.mxu0 0.0
    %1678 = vmatpush1.xpose.msra.mxu0 0.0
    %1679 = vmatprep.subr.mxu0 0.0
    %1680 = vmatpush1.xpose.msra.mxu0 %v1649
    %1681 = vmatprep.subr.mxu0 0.0
    %1682 = vmatpush1.xpose.msra.mxu0 %v1647
    %1683 = vmatprep.subr.mxu0 0.0
    %1684 = vmatpush2.xpose.msra.mxu0 0.0
    %1685 = vmatprep.subr.mxu0 0.0
    %1686 = vmatpush2.xpose.msra.mxu0 0.0
    %1687 = vmatprep.subr.mxu0 0.0
    %1688 = vmatpush2.xpose.msra.mxu0 0.0
    %1689 = vmatprep.subr.mxu0 0.0
    %1690 = vmatpush2.xpose.msra.mxu0 0.0
    %1691 = vmatprep.subr.mxu0 0.0
    %1692 = vmatpush2.xpose.msra.mxu0 0.0
    %1693 = vmatprep.subr.mxu0 0.0
    %1694 = vmatpush2.xpose.msra.mxu0 0.0
    %1695 = vmatprep.subr.mxu0 0.0
    %1696 = vmatpush2.xpose.msra.mxu0 0.0
    %1697 = vmatprep.subr.mxu0 0.0
    %1698 = vmatpush2.xpose.msra.mxu0 0.0
    %1699 = vmatprep.subr.mxu0 0.0
    %1700 = vmatpush2.xpose.msra.mxu0 0.0
    %1701 = vmatprep.subr.mxu0 0.0
    %1702 = vmatpush2.xpose.msra.mxu0 0.0
    %1703 = vmatprep.subr.mxu0 0.0
    %1704 = vmatpush2.xpose.msra.mxu0 0.0
    %1705 = vmatprep.subr.mxu0 0.0
    %1706 = vmatpush2.xpose.msra.mxu0 0.0
    %1707 = vmatprep.subr.mxu0 0.0
    %1708 = vmatpush2.xpose.msra.mxu0 0.0
    %1709 = vmatprep.subr.mxu0 0.0
    %1710 = vmatpush2.xpose.msra.mxu0 0.0
    %1711 = vmatprep.subr.mxu0 0.0
    %1712 = vmatpush2.xpose.msra.mxu0 0.0
    %1713 = vmatprep.subr.mxu0 0.0
    %1714 = vmatpush2.xpose.msra.mxu0 0.0
    %1715 = vmatprep.mubr.f32.mxu0 0.0
    %1716 = vmatmul.mubr.f32.gmra.mxu0 %v1643
    %v1717 = vpop.f32.mrf.mxu0
    %v1718 = vadd.f32 0.0, %v1717
    %v1719 = vpop.f32.mrf.mxu0
    %1720 = vmatprep.mubr.f32.mxu0 0.0
    %1721 = vmatmul.mubr.f32.gmra.mxu0 %v1645
    %v1722 = vpop.f32.mrf.mxu0
    %v1723 = vadd.f32 0.0, %v1722
    %v1724 = vpop.f32.mrf.mxu0
    %1725 = vdwg.mxu0
    %v1726 = vmul.f32 %v1718, 0.25
    %v1727 = vmul.f32 %v1723, 0.25
    %v1728 = vlaneseq
    %v1729 = vshrl.u32 %v1728, 7
    %v1730 = vsub.s32 0, %v1729
    %v1731 = vrot.slane %v1636, %v1730
    %v1732 = vadd.f32 %v1726, %v1731
    %v1733 = vadd.f32 %v1727, %v1731
    %v1734 = vsel %vm202, %v1732, -inf
    %1735 = vmax.xlane.f32.xlu0 %v1734
    %v1736 = vpop.xlane.xlu0 %1735
    %v1737 = vsel %vm202, %v1733, -inf
    %1738 = vmax.xlane.f32.xlu0 %v1737
    %v1739 = vpop.xlane.xlu0 %1738
    %v1740 = vsub.f32 %v1732, %v1736
    %v1741 = vsub.f32 %v1733, %v1739
    %v1742 = vmul.f32 %v1740, 1.442695
    %v1743 = vpow.pop %v1742
    %v1744 = vmul.f32 %v1741, 1.442695
    %v1745 = vpow.pop %v1744
    %v1746 = vsel %vm202, %v1743, 0.0
    %1747 = vadd.xlane.f32.xlu0 %v1746
    %v1748 = vpop.xlane.xlu0 %1747
    %v1749 = vsel %vm202, %v1745, 0.0
    %1750 = vadd.xlane.f32.xlu0 %v1749
    %v1751 = vpop.xlane.xlu0 %1750
    %v1752 = vrcp.pop %v1748
    %v1753 = vrcp.pop %v1751
    %v1754 = vmul.f32 %v1743, %v1752
    %v1755 = vmul.f32 %v1745, %v1753
    %1756 = vrot.lane.b32.xlu0 %v1204, 96
    %v1757 = vpop.permute.xlu0 %1756
    %1758 = vrot.lane.b32.xlu0 %v1209, 96
    %v1759 = vpop.permute.xlu0 %1758
    %v1763 = vsel %vm202, %v1754, 0
    %v1766 = vsel %vm202, %v1755, 0
    %1768 = vmatprep.subr.mxu0 0.0
    %1769 = vmatpush1.msra.mxu0 0.0
    %1770 = vmatprep.subr.mxu0 0.0
    %1771 = vmatpush1.msra.mxu0 0.0
    %1772 = vmatprep.subr.mxu0 0.0
    %1773 = vmatpush1.msra.mxu0 0.0
    %1774 = vmatprep.subr.mxu0 0.0
    %1775 = vmatpush1.msra.mxu0 0.0
    %1776 = vmatprep.subr.mxu0 0.0
    %1777 = vmatpush1.msra.mxu0 0.0
    %1778 = vmatprep.subr.mxu0 0.0
    %1779 = vmatpush1.msra.mxu0 0.0
    %1780 = vmatprep.subr.mxu0 0.0
    %1781 = vmatpush1.msra.mxu0 0.0
    %1782 = vmatprep.subr.mxu0 0.0
    %1783 = vmatpush1.msra.mxu0 0.0
    %1784 = vmatprep.subr.mxu0 0.0
    %1785 = vmatpush1.msra.mxu0 0.0
    %1786 = vmatprep.subr.mxu0 0.0
    %1787 = vmatpush1.msra.mxu0 0.0
    %1788 = vmatprep.subr.mxu0 0.0
    %1789 = vmatpush1.msra.mxu0 0.0
    %1790 = vmatprep.subr.mxu0 0.0
    %1791 = vmatpush1.msra.mxu0 0.0
    %1792 = vmatprep.subr.mxu0 0.0
    %1793 = vmatpush1.msra.mxu0 0.0
    %1794 = vmatprep.subr.mxu0 0.0
    %1795 = vmatpush1.msra.mxu0 0.0
    %1796 = vmatprep.subr.mxu0 0.0
    %1797 = vmatpush1.msra.mxu0 %v1759
    %1798 = vmatprep.subr.mxu0 0.0
    %1799 = vmatpush1.msra.mxu0 %v1757
    %1800 = vmatprep.subr.mxu0 0.0
    %1801 = vmatpush2.msra.mxu0 0.0
    %1802 = vmatprep.subr.mxu0 0.0
    %1803 = vmatpush2.msra.mxu0 0.0
    %1804 = vmatprep.subr.mxu0 0.0
    %1805 = vmatpush2.msra.mxu0 0.0
    %1806 = vmatprep.subr.mxu0 0.0
    %1807 = vmatpush2.msra.mxu0 0.0
    %1808 = vmatprep.subr.mxu0 0.0
    %1809 = vmatpush2.msra.mxu0 0.0
    %1810 = vmatprep.subr.mxu0 0.0
    %1811 = vmatpush2.msra.mxu0 0.0
    %1812 = vmatprep.subr.mxu0 0.0
    %1813 = vmatpush2.msra.mxu0 0.0
    %1814 = vmatprep.subr.mxu0 0.0
    %1815 = vmatpush2.msra.mxu0 0.0
    %1816 = vmatprep.subr.mxu0 0.0
    %1817 = vmatpush2.msra.mxu0 0.0
    %1818 = vmatprep.subr.mxu0 0.0
    %1819 = vmatpush2.msra.mxu0 0.0
    %1820 = vmatprep.subr.mxu0 0.0
    %1821 = vmatpush2.msra.mxu0 0.0
    %1822 = vmatprep.subr.mxu0 0.0
    %1823 = vmatpush2.msra.mxu0 0.0
    %1824 = vmatprep.subr.mxu0 0.0
    %1825 = vmatpush2.msra.mxu0 0.0
    %1826 = vmatprep.subr.mxu0 0.0
    %1827 = vmatpush2.msra.mxu0 0.0
    %1828 = vmatprep.subr.mxu0 0.0
    %1829 = vmatpush2.msra.mxu0 0.0
    %1830 = vmatprep.subr.mxu0 0.0
    %1831 = vmatpush2.msra.mxu0 0.0
    %1832 = vmatprep.mubr.f32.mxu0 0.0
    %1833 = vmatmul.mubr.f32.gmra.mxu0 %v1763
    %v1834 = vpop.f32.mrf.mxu0
    %v1835 = vadd.f32 0.0, %v1834
    %v1836 = vpop.f32.mrf.mxu0
    %1837 = vmatprep.mubr.f32.mxu0 0.0
    %1838 = vmatmul.mubr.f32.gmra.mxu0 %v1766
    %v1839 = vpop.f32.mrf.mxu0
    %v1840 = vadd.f32 0.0, %v1839
    %v1841 = vpop.f32.mrf.mxu0
    %1842 = vdwg.mxu0
    %1843 = vrot.lane.b32.xlu0 %v1204, 120
    %v1844 = vpop.permute.xlu0 %1843
    %1845 = vrot.lane.b32.xlu0 %v1209, 120
    %v1846 = vpop.permute.xlu0 %1845
    %1847 = vrot.lane.b32.xlu0 %v1204, 104
    %v1848 = vpop.permute.xlu0 %1847
    %1849 = vrot.lane.b32.xlu0 %v1209, 104
    %v1850 = vpop.permute.xlu0 %1849
    %v1851 = vsel %vm1220, %v1844, 0
    %v1853 = vsel %vm1220, %v1846, 0
    %v1855 = vsel %vm1220, %v1848, 0
    %v1857 = vsel %vm1220, %v1850, 0
    %1859 = vmatprep.subr.mxu0 0.0
    %1860 = vmatpush1.xpose.msra.mxu0 0.0
    %1861 = vmatprep.subr.mxu0 0.0
    %1862 = vmatpush1.xpose.msra.mxu0 0.0
    %1863 = vmatprep.subr.mxu0 0.0
    %1864 = vmatpush1.xpose.msra.mxu0 0.0
    %1865 = vmatprep.subr.mxu0 0.0
    %1866 = vmatpush1.xpose.msra.mxu0 0.0
    %1867 = vmatprep.subr.mxu0 0.0
    %1868 = vmatpush1.xpose.msra.mxu0 0.0
    %1869 = vmatprep.subr.mxu0 0.0
    %1870 = vmatpush1.xpose.msra.mxu0 0.0
    %1871 = vmatprep.subr.mxu0 0.0
    %1872 = vmatpush1.xpose.msra.mxu0 0.0
    %1873 = vmatprep.subr.mxu0 0.0
    %1874 = vmatpush1.xpose.msra.mxu0 0.0
    %1875 = vmatprep.subr.mxu0 0.0
    %1876 = vmatpush1.xpose.msra.mxu0 0.0
    %1877 = vmatprep.subr.mxu0 0.0
    %1878 = vmatpush1.xpose.msra.mxu0 0.0
    %1879 = vmatprep.subr.mxu0 0.0
    %1880 = vmatpush1.xpose.msra.mxu0 0.0
    %1881 = vmatprep.subr.mxu0 0.0
    %1882 = vmatpush1.xpose.msra.mxu0 0.0
    %1883 = vmatprep.subr.mxu0 0.0
    %1884 = vmatpush1.xpose.msra.mxu0 0.0
    %1885 = vmatprep.subr.mxu0 0.0
    %1886 = vmatpush1.xpose.msra.mxu0 0.0
    %1887 = vmatprep.subr.mxu0 0.0
    %1888 = vmatpush1.xpose.msra.mxu0 %v1857
    %1889 = vmatprep.subr.mxu0 0.0
    %1890 = vmatpush1.xpose.msra.mxu0 %v1855
    %1891 = vmatprep.subr.mxu0 0.0
    %1892 = vmatpush2.xpose.msra.mxu0 0.0
    %1893 = vmatprep.subr.mxu0 0.0
    %1894 = vmatpush2.xpose.msra.mxu0 0.0
    %1895 = vmatprep.subr.mxu0 0.0
    %1896 = vmatpush2.xpose.msra.mxu0 0.0
    %1897 = vmatprep.subr.mxu0 0.0
    %1898 = vmatpush2.xpose.msra.mxu0 0.0
    %1899 = vmatprep.subr.mxu0 0.0
    %1900 = vmatpush2.xpose.msra.mxu0 0.0
    %1901 = vmatprep.subr.mxu0 0.0
    %1902 = vmatpush2.xpose.msra.mxu0 0.0
    %1903 = vmatprep.subr.mxu0 0.0
    %1904 = vmatpush2.xpose.msra.mxu0 0.0
    %1905 = vmatprep.subr.mxu0 0.0
    %1906 = vmatpush2.xpose.msra.mxu0 0.0
    %1907 = vmatprep.subr.mxu0 0.0
    %1908 = vmatpush2.xpose.msra.mxu0 0.0
    %1909 = vmatprep.subr.mxu0 0.0
    %1910 = vmatpush2.xpose.msra.mxu0 0.0
    %1911 = vmatprep.subr.mxu0 0.0
    %1912 = vmatpush2.xpose.msra.mxu0 0.0
    %1913 = vmatprep.subr.mxu0 0.0
    %1914 = vmatpush2.xpose.msra.mxu0 0.0
    %1915 = vmatprep.subr.mxu0 0.0
    %1916 = vmatpush2.xpose.msra.mxu0 0.0
    %1917 = vmatprep.subr.mxu0 0.0
    %1918 = vmatpush2.xpose.msra.mxu0 0.0
    %1919 = vmatprep.subr.mxu0 0.0
    %1920 = vmatpush2.xpose.msra.mxu0 0.0
    %1921 = vmatprep.subr.mxu0 0.0
    %1922 = vmatpush2.xpose.msra.mxu0 0.0
    %1923 = vmatprep.mubr.f32.mxu0 0.0
    %1924 = vmatmul.mubr.f32.gmra.mxu0 %v1851
    %v1925 = vpop.f32.mrf.mxu0
    %v1926 = vadd.f32 0.0, %v1925
    %v1927 = vpop.f32.mrf.mxu0
    %1928 = vmatprep.mubr.f32.mxu0 0.0
    %1929 = vmatmul.mubr.f32.gmra.mxu0 %v1853
    %v1930 = vpop.f32.mrf.mxu0
    %v1931 = vadd.f32 0.0, %v1930
    %v1932 = vpop.f32.mrf.mxu0
    %1933 = vdwg.mxu0
    %v1934 = vmul.f32 %v1926, 0.25
    %v1935 = vmul.f32 %v1931, 0.25
    %v1936 = vadd.f32 %v1934, %v1731
    %v1937 = vadd.f32 %v1935, %v1731
    %v1938 = vsel %vm202, %v1936, -inf
    %1939 = vmax.xlane.f32.xlu0 %v1938
    %v1940 = vpop.xlane.xlu0 %1939
    %v1941 = vsel %vm202, %v1937, -inf
    %1942 = vmax.xlane.f32.xlu0 %v1941
    %v1943 = vpop.xlane.xlu0 %1942
    %v1944 = vsub.f32 %v1936, %v1940
    %v1945 = vsub.f32 %v1937, %v1943
    %v1946 = vmul.f32 %v1944, 1.442695
    %v1947 = vpow.pop %v1946
    %v1948 = vmul.f32 %v1945, 1.442695
    %v1949 = vpow.pop %v1948
    %v1950 = vsel %vm202, %v1947, 0.0
    %1951 = vadd.xlane.f32.xlu0 %v1950
    %v1952 = vpop.xlane.xlu0 %1951
    %v1953 = vsel %vm202, %v1949, 0.0
    %1954 = vadd.xlane.f32.xlu0 %v1953
    %v1955 = vpop.xlane.xlu0 %1954
    %v1956 = vrcp.pop %v1952
    %v1957 = vrcp.pop %v1955
    %v1958 = vmul.f32 %v1947, %v1956
    %v1959 = vmul.f32 %v1949, %v1957
    %1960 = vrot.lane.b32.xlu0 %v1204, 88
    %v1961 = vpop.permute.xlu0 %1960
    %1962 = vrot.lane.b32.xlu0 %v1209, 88
    %v1963 = vpop.permute.xlu0 %1962
    %v1967 = vsel %vm202, %v1958, 0
    %v1970 = vsel %vm202, %v1959, 0
    %1972 = vmatprep.subr.mxu0 0.0
    %1973 = vmatpush1.msra.mxu0 0.0
    %1974 = vmatprep.subr.mxu0 0.0
    %1975 = vmatpush1.msra.mxu0 0.0
    %1976 = vmatprep.subr.mxu0 0.0
    %1977 = vmatpush1.msra.mxu0 0.0
    %1978 = vmatprep.subr.mxu0 0.0
    %1979 = vmatpush1.msra.mxu0 0.0
    %1980 = vmatprep.subr.mxu0 0.0
    %1981 = vmatpush1.msra.mxu0 0.0
    %1982 = vmatprep.subr.mxu0 0.0
    %1983 = vmatpush1.msra.mxu0 0.0
    %1984 = vmatprep.subr.mxu0 0.0
    %1985 = vmatpush1.msra.mxu0 0.0
    %1986 = vmatprep.subr.mxu0 0.0
    %1987 = vmatpush1.msra.mxu0 0.0
    %1988 = vmatprep.subr.mxu0 0.0
    %1989 = vmatpush1.msra.mxu0 0.0
    %1990 = vmatprep.subr.mxu0 0.0
    %1991 = vmatpush1.msra.mxu0 0.0
    %1992 = vmatprep.subr.mxu0 0.0
    %1993 = vmatpush1.msra.mxu0 0.0
    %1994 = vmatprep.subr.mxu0 0.0
    %1995 = vmatpush1.msra.mxu0 0.0
    %1996 = vmatprep.subr.mxu0 0.0
    %1997 = vmatpush1.msra.mxu0 0.0
    %1998 = vmatprep.subr.mxu0 0.0
    %1999 = vmatpush1.msra.mxu0 0.0
    %2000 = vmatprep.subr.mxu0 0.0
    %2001 = vmatpush1.msra.mxu0 %v1963
    %2002 = vmatprep.subr.mxu0 0.0
    %2003 = vmatpush1.msra.mxu0 %v1961
    %2004 = vmatprep.subr.mxu0 0.0
    %2005 = vmatpush2.msra.mxu0 0.0
    %2006 = vmatprep.subr.mxu0 0.0
    %2007 = vmatpush2.msra.mxu0 0.0
    %2008 = vmatprep.subr.mxu0 0.0
    %2009 = vmatpush2.msra.mxu0 0.0
    %2010 = vmatprep.subr.mxu0 0.0
    %2011 = vmatpush2.msra.mxu0 0.0
    %2012 = vmatprep.subr.mxu0 0.0
    %2013 = vmatpush2.msra.mxu0 0.0
    %2014 = vmatprep.subr.mxu0 0.0
    %2015 = vmatpush2.msra.mxu0 0.0
    %2016 = vmatprep.subr.mxu0 0.0
    %2017 = vmatpush2.msra.mxu0 0.0
    %2018 = vmatprep.subr.mxu0 0.0
    %2019 = vmatpush2.msra.mxu0 0.0
    %2020 = vmatprep.subr.mxu0 0.0
    %2021 = vmatpush2.msra.mxu0 0.0
    %2022 = vmatprep.subr.mxu0 0.0
    %2023 = vmatpush2.msra.mxu0 0.0
    %2024 = vmatprep.subr.mxu0 0.0
    %2025 = vmatpush2.msra.mxu0 0.0
    %2026 = vmatprep.subr.mxu0 0.0
    %2027 = vmatpush2.msra.mxu0 0.0
    %2028 = vmatprep.subr.mxu0 0.0
    %2029 = vmatpush2.msra.mxu0 0.0
    %2030 = vmatprep.subr.mxu0 0.0
    %2031 = vmatpush2.msra.mxu0 0.0
    %2032 = vmatprep.subr.mxu0 0.0
    %2033 = vmatpush2.msra.mxu0 0.0
    %2034 = vmatprep.subr.mxu0 0.0
    %2035 = vmatpush2.msra.mxu0 0.0
    %2036 = vmatprep.mubr.f32.mxu0 0.0
    %2037 = vmatmul.mubr.f32.gmra.mxu0 %v1967
    %v2038 = vpop.f32.mrf.mxu0
    %v2039 = vadd.f32 0.0, %v2038
    %v2040 = vpop.f32.mrf.mxu0
    %2041 = vmatprep.mubr.f32.mxu0 0.0
    %2042 = vmatmul.mubr.f32.gmra.mxu0 %v1970
    %v2043 = vpop.f32.mrf.mxu0
    %v2044 = vadd.f32 0.0, %v2043
    %v2045 = vpop.f32.mrf.mxu0
    %2046 = vdwg.mxu0
    %2049 = vrot.lane.b32.xlu0 %v2039, 8
    %v2050 = vpop.permute.xlu0 %2049
    %2051 = vrot.lane.b32.xlu0 %v2044, 8
    %v2052 = vpop.permute.xlu0 %2051
    %v2055 = vsel %vm1220, %v1835, %v2050
    %v2056 = vsel %vm1220, %v1840, %v2052
    %v2057 = vld [vmem:[#allocation15] sm:$0xff]
    %v2058 = vld [vmem:[#allocation15 + $0x8] sm:$0xff]
    %v2059 = vld [vmem:[#allocation17] sm:$0x1]
    %v2061 = vlaneseq
    %v2062 = vshrl.u32 %v2061, 7
    %v2063 = vsub.s32 0, %v2062
    %v2064 = vrot.slane %v2059, %v2063
    %v2067 = vsel %vm202, %v1633, 0
    %v2070 = vsel %vm202, %v1634, 0
    %v2073 = vsel %vm202, %v2055, 0
    %v2076 = vsel %vm202, %v2056, 0
    %2078 = vmatprep.subr.mxu0 0.0
    %2079 = vmatpush1.msra.mxu0 0.0
    %2080 = vmatprep.subr.mxu0 0.0
    %2081 = vmatpush1.msra.mxu0 0.0
    %2082 = vmatprep.subr.mxu0 0.0
    %2083 = vmatpush1.msra.mxu0 0.0
    %2084 = vmatprep.subr.mxu0 0.0
    %2085 = vmatpush1.msra.mxu0 0.0
    %2086 = vmatprep.subr.mxu0 0.0
    %2087 = vmatpush1.msra.mxu0 0.0
    %2088 = vmatprep.subr.mxu0 0.0
    %2089 = vmatpush1.msra.mxu0 0.0
    %2090 = vmatprep.subr.mxu0 0.0
    %2091 = vmatpush1.msra.mxu0 0.0
    %2092 = vmatprep.subr.mxu0 0.0
    %2093 = vmatpush1.msra.mxu0 0.0
    %2094 = vmatprep.subr.mxu0 0.0
    %2095 = vmatpush1.msra.mxu0 0.0
    %2096 = vmatprep.subr.mxu0 0.0
    %2097 = vmatpush1.msra.mxu0 0.0
    %2098 = vmatprep.subr.mxu0 0.0
    %2099 = vmatpush1.msra.mxu0 0.0
    %2100 = vmatprep.subr.mxu0 0.0
    %2101 = vmatpush1.msra.mxu0 0.0
    %2102 = vmatprep.subr.mxu0 0.0
    %2103 = vmatpush1.msra.mxu0 0.0
    %2104 = vmatprep.subr.mxu0 0.0
    %2105 = vmatpush1.msra.mxu0 0.0
    %2106 = vmatprep.subr.mxu0 0.0
    %2107 = vmatpush1.msra.mxu0 %v2058
    %2108 = vmatprep.subr.mxu0 0.0
    %2109 = vmatpush1.msra.mxu0 %v2057
    %2110 = vmatprep.subr.mxu0 0.0
    %2111 = vmatpush2.msra.mxu0 0.0
    %2112 = vmatprep.subr.mxu0 0.0
    %2113 = vmatpush2.msra.mxu0 0.0
    %2114 = vmatprep.subr.mxu0 0.0
    %2115 = vmatpush2.msra.mxu0 0.0
    %2116 = vmatprep.subr.mxu0 0.0
    %2117 = vmatpush2.msra.mxu0 0.0
    %2118 = vmatprep.subr.mxu0 0.0
    %2119 = vmatpush2.msra.mxu0 0.0
    %2120 = vmatprep.subr.mxu0 0.0
    %2121 = vmatpush2.msra.mxu0 0.0
    %2122 = vmatprep.subr.mxu0 0.0
    %2123 = vmatpush2.msra.mxu0 0.0
    %2124 = vmatprep.subr.mxu0 0.0
    %2125 = vmatpush2.msra.mxu0 0.0
    %2126 = vmatprep.subr.mxu0 0.0
    %2127 = vmatpush2.msra.mxu0 0.0
    %2128 = vmatprep.subr.mxu0 0.0
    %2129 = vmatpush2.msra.mxu0 0.0
    %2130 = vmatprep.subr.mxu0 0.0
    %2131 = vmatpush2.msra.mxu0 0.0
    %2132 = vmatprep.subr.mxu0 0.0
    %2133 = vmatpush2.msra.mxu0 0.0
    %2134 = vmatprep.subr.mxu0 0.0
    %2135 = vmatpush2.msra.mxu0 0.0
    %2136 = vmatprep.subr.mxu0 0.0
    %2137 = vmatpush2.msra.mxu0 0.0
    %2138 = vmatprep.subr.mxu0 0.0
    %2139 = vmatpush2.msra.mxu0 0.0
    %2140 = vmatprep.subr.mxu0 0.0
    %2141 = vmatpush2.msra.mxu0 0.0
    %2142 = vmatprep.mubr.f32.mxu0 0.0
    %2143 = vmatmul.mubr.f32.gmra.mxu0 %v2067
    %v2144 = vpop.f32.mrf.mxu0
    %v2145 = vadd.f32 %v2064, %v2144
    %v2146 = vpop.f32.mrf.mxu0
    %2147 = vmatprep.mubr.f32.mxu0 0.0
    %2148 = vmatmul.mubr.f32.gmra.mxu0 %v2070
    %v2149 = vpop.f32.mrf.mxu0
    %v2150 = vadd.f32 %v2064, %v2149
    %v2151 = vpop.f32.mrf.mxu0
    %2152 = vmatprep.mubr.f32.mxu0 0.0
    %2153 = vmatmul.mubr.f32.gmra.mxu0 %v2073
    %v2154 = vpop.f32.mrf.mxu0
    %v2155 = vadd.f32 %v2064, %v2154
    %v2156 = vpop.f32.mrf.mxu0
    %2157 = vmatprep.mubr.f32.mxu0 0.0
    %2158 = vmatmul.mubr.f32.gmra.mxu0 %v2076
    %v2159 = vpop.f32.mrf.mxu0
    %v2160 = vadd.f32 %v2064, %v2159
    %v2161 = vpop.f32.mrf.mxu0
    %2162 = vdwg.mxu0
    %v2163 = vadd.f32 %v2145, %v1102
    %v2164 = vadd.f32 %v2150, %v1103
    %v2165 = vadd.f32 %v2155, %v1104
    %v2166 = vadd.f32 %v2160, %v1105
    %v2167 = vld [vmem:[%s16] sm:$0xff]
    %v2168 = vld [vmem:[%s16 + $0x8] sm:$0xff]
    %v2169 = vld [vmem:[#allocation18] sm:$0x1]
    %v2171 = vlaneseq
    %v2172 = vshrl.u32 %v2171, 7
    %v2173 = vsub.s32 0, %v2172
    %v2174 = vrot.slane %v2169, %v2173
    %v2177 = vsel %vm202, %v2163, 0
    %v2180 = vsel %vm202, %v2164, 0
    %v2183 = vsel %vm202, %v2165, 0
    %v2186 = vsel %vm202, %v2166, 0
    %2188 = vmatprep.subr.mxu0 0.0
    %2189 = vmatpush1.msra.mxu0 0.0
    %2190 = vmatprep.subr.mxu0 0.0
    %2191 = vmatpush1.msra.mxu0 0.0
    %2192 = vmatprep.subr.mxu0 0.0
    %2193 = vmatpush1.msra.mxu0 0.0
    %2194 = vmatprep.subr.mxu0 0.0
    %2195 = vmatpush1.msra.mxu0 0.0
    %2196 = vmatprep.subr.mxu0 0.0
    %2197 = vmatpush1.msra.mxu0 0.0
    %2198 = vmatprep.subr.mxu0 0.0
    %2199 = vmatpush1.msra.mxu0 0.0
    %2200 = vmatprep.subr.mxu0 0.0
    %2201 = vmatpush1.msra.mxu0 0.0
    %2202 = vmatprep.subr.mxu0 0.0
    %2203 = vmatpush1.msra.mxu0 0.0
    %2204 = vmatprep.subr.mxu0 0.0
    %2205 = vmatpush1.msra.mxu0 0.0
    %2206 = vmatprep.subr.mxu0 0.0
    %2207 = vmatpush1.msra.mxu0 0.0
    %2208 = vmatprep.subr.mxu0 0.0
    %2209 = vmatpush1.msra.mxu0 0.0
    %2210 = vmatprep.subr.mxu0 0.0
    %2211 = vmatpush1.msra.mxu0 0.0
    %2212 = vmatprep.subr.mxu0 0.0
    %2213 = vmatpush1.msra.mxu0 0.0
    %2214 = vmatprep.subr.mxu0 0.0
    %2215 = vmatpush1.msra.mxu0 0.0
    %2216 = vmatprep.subr.mxu0 0.0
    %2217 = vmatpush1.msra.mxu0 %v2168
    %2218 = vmatprep.subr.mxu0 0.0
    %2219 = vmatpush1.msra.mxu0 %v2167
    %2220 = vmatprep.subr.mxu0 0.0
    %2221 = vmatpush2.msra.mxu0 0.0
    %2222 = vmatprep.subr.mxu0 0.0
    %2223 = vmatpush2.msra.mxu0 0.0
    %2224 = vmatprep.subr.mxu0 0.0
    %2225 = vmatpush2.msra.mxu0 0.0
    %2226 = vmatprep.subr.mxu0 0.0
    %2227 = vmatpush2.msra.mxu0 0.0
    %2228 = vmatprep.subr.mxu0 0.0
    %2229 = vmatpush2.msra.mxu0 0.0
    %2230 = vmatprep.subr.mxu0 0.0
    %2231 = vmatpush2.msra.mxu0 0.0
    %2232 = vmatprep.subr.mxu0 0.0
    %2233 = vmatpush2.msra.mxu0 0.0
    %2234 = vmatprep.subr.mxu0 0.0
    %2235 = vmatpush2.msra.mxu0 0.0
    %2236 = vmatprep.subr.mxu0 0.0
    %2237 = vmatpush2.msra.mxu0 0.0
    %2238 = vmatprep.subr.mxu0 0.0
    %2239 = vmatpush2.msra.mxu0 0.0
    %2240 = vmatprep.subr.mxu0 0.0
    %2241 = vmatpush2.msra.mxu0 0.0
    %2242 = vmatprep.subr.mxu0 0.0
    %2243 = vmatpush2.msra.mxu0 0.0
    %2244 = vmatprep.subr.mxu0 0.0
    %2245 = vmatpush2.msra.mxu0 0.0
    %2246 = vmatprep.subr.mxu0 0.0
    %2247 = vmatpush2.msra.mxu0 0.0
    %2248 = vmatprep.subr.mxu0 0.0
    %2249 = vmatpush2.msra.mxu0 0.0
    %2250 = vmatprep.subr.mxu0 0.0
    %2251 = vmatpush2.msra.mxu0 0.0
    %2252 = vmatprep.mubr.f32.mxu0 0.0
    %2253 = vmatmul.mubr.f32.gmra.mxu0 %v2177
    %v2254 = vpop.f32.mrf.mxu0
    %v2255 = vadd.f32 %v2174, %v2254
    %v2256 = vpop.f32.mrf.mxu0
    %2257 = vmatprep.mubr.f32.mxu0 0.0
    %2258 = vmatmul.mubr.f32.gmra.mxu0 %v2180
    %v2259 = vpop.f32.mrf.mxu0
    %v2260 = vadd.f32 %v2174, %v2259
    %v2261 = vpop.f32.mrf.mxu0
    %2262 = vmatprep.mubr.f32.mxu0 0.0
    %2263 = vmatmul.mubr.f32.gmra.mxu0 %v2183
    %v2264 = vpop.f32.mrf.mxu0
    %v2265 = vadd.f32 %v2174, %v2264
    %v2266 = vpop.f32.mrf.mxu0
    %2267 = vmatprep.mubr.f32.mxu0 0.0
    %2268 = vmatmul.mubr.f32.gmra.mxu0 %v2186
    %v2269 = vpop.f32.mrf.mxu0
    %v2270 = vadd.f32 %v2174, %v2269
    %v2271 = vpop.f32.mrf.mxu0
    %2272 = vdwg.mxu0
    %v2273 = vld [vmem:[%s3] sm:$0x3]
    %v2275 = vsel %vm634, %v2273, 0
    %2277 = vmatprep.subr.mxu0 0.0
    %2278 = vmatpush1.msra.mxu0 0.0
    %2279 = vmatprep.subr.mxu0 0.0
    %2280 = vmatpush1.msra.mxu0 0.0
    %2281 = vmatprep.subr.mxu0 0.0
    %2282 = vmatpush1.msra.mxu0 0.0
    %2283 = vmatprep.subr.mxu0 0.0
    %2284 = vmatpush1.msra.mxu0 0.0
    %2285 = vmatprep.subr.mxu0 0.0
    %2286 = vmatpush1.msra.mxu0 0.0
    %2287 = vmatprep.subr.mxu0 0.0
    %2288 = vmatpush1.msra.mxu0 0.0
    %2289 = vmatprep.subr.mxu0 0.0
    %2290 = vmatpush1.msra.mxu0 0.0
    %2291 = vmatprep.subr.mxu0 0.0
    %2292 = vmatpush1.msra.mxu0 0.0
    %2293 = vmatprep.subr.mxu0 0.0
    %2294 = vmatpush1.msra.mxu0 0.0
    %2295 = vmatprep.subr.mxu0 0.0
    %2296 = vmatpush1.msra.mxu0 0.0
    %2297 = vmatprep.subr.mxu0 0.0
    %2298 = vmatpush1.msra.mxu0 0.0
    %2299 = vmatprep.subr.mxu0 0.0
    %2300 = vmatpush1.msra.mxu0 0.0
    %2301 = vmatprep.subr.mxu0 0.0
    %2302 = vmatpush1.msra.mxu0 %v2270
    %2303 = vmatprep.subr.mxu0 0.0
    %2304 = vmatpush1.msra.mxu0 %v2265
    %2305 = vmatprep.subr.mxu0 0.0
    %2306 = vmatpush1.msra.mxu0 %v2260
    %2307 = vmatprep.subr.mxu0 0.0
    %2308 = vmatpush1.msra.mxu0 %v2255
    %2309 = vmatprep.subr.mxu0 0.0
    %2310 = vmatpush2.msra.mxu0 0.0
    %2311 = vmatprep.subr.mxu0 0.0
    %2312 = vmatpush2.msra.mxu0 0.0
    %2313 = vmatprep.subr.mxu0 0.0
    %2314 = vmatpush2.msra.mxu0 0.0
    %2315 = vmatprep.subr.mxu0 0.0
    %2316 = vmatpush2.msra.mxu0 0.0
    %2317 = vmatprep.subr.mxu0 0.0
    %2318 = vmatpush2.msra.mxu0 0.0
    %2319 = vmatprep.subr.mxu0 0.0
    %2320 = vmatpush2.msra.mxu0 0.0
    %2321 = vmatprep.subr.mxu0 0.0
    %2322 = vmatpush2.msra.mxu0 0.0
    %2323 = vmatprep.subr.mxu0 0.0
    %2324 = vmatpush2.msra.mxu0 0.0
    %2325 = vmatprep.subr.mxu0 0.0
    %2326 = vmatpush2.msra.mxu0 0.0
    %2327 = vmatprep.subr.mxu0 0.0
    %2328 = vmatpush2.msra.mxu0 0.0
    %2329 = vmatprep.subr.mxu0 0.0
    %2330 = vmatpush2.msra.mxu0 0.0
    %2331 = vmatprep.subr.mxu0 0.0
    %2332 = vmatpush2.msra.mxu0 0.0
    %2333 = vmatprep.subr.mxu0 0.0
    %2334 = vmatpush2.msra.mxu0 0.0
    %2335 = vmatprep.subr.mxu0 0.0
    %2336 = vmatpush2.msra.mxu0 0.0
    %2337 = vmatprep.subr.mxu0 0.0
    %2338 = vmatpush2.msra.mxu0 0.0
    %2339 = vmatprep.subr.mxu0 0.0
    %2340 = vmatpush2.msra.mxu0 0.0
    %2341 = vmatprep.mubr.f32.mxu0 0.0
    %2342 = vmatmul.mubr.f32.gmra.mxu0 %v2275
    %v2343 = vpop.f32.mrf.mxu0
    %v2344 = vadd.f32 0.0, %v2343
    %v2345 = vpop.f32.mrf.mxu0
    %2346 = vdwg.mxu0
    %vm2347 = vcmask 58368
    %2348 = vst.msk [vmem:[#allocation20] sm:$0x3] %vm2347, %v2344
    // Predicated region
    $region114: #{mel_style_encoder_forward.1} parent=1 // pred_check
      _
    $region115: #{mel_style_encoder_forward.1} parent=1 // pred_check_branch
      %2350 = sbr.rel (0) target = $region117
    $region116: #{mel_style_encoder_forward.1} parent=1 // pred_region
      %s2352 = ssub.s32 32, 32
      %2353 = vsyncadd [#allocation5], %s2352
      %s2355 = sshll.u32 [#allocation20], 4
      %s2356 = int_to_ptr.vmem [resolvable:$true] %s2355
      %2358 = dma.vmem_to_hbm [thread:$0]  %s2356, 32, %s18, [#allocation5]
    $region117: #{mel_style_encoder_forward.1} parent=1 // pred_fallthru
      _
    // Predicated region
    $region118: #{mel_style_encoder_forward.1} parent=1 // pred_check
      _
    $region119: #{mel_style_encoder_forward.1} parent=1 // pred_check_branch
      %2360 = sbr.rel (0) target = $region121
    $region120: #{mel_style_encoder_forward.1} parent=1 // pred_region
      %2361 = dma.done [#allocation5], 32
    $region121: #{mel_style_encoder_forward.1} parent=1 // pred_fallthru
      _
    %2362 = vsyncpa [#allocation4], 1
    %2363 = vsyncpa [#allocation7], 1
    %2364 = vsyncpa [#allocation10], 1
    %2365 = vsyncpa [#allocation13], 1
    %2366 = vsyncpa [#allocation16], 1
    %2367 = vsyncpa [#allocation19], 1
    %2368 = vsyncpa [#allocation5], 1

</llo_original>
